<compile_context>
chip_gen: v7x
topology: tpu7x:2x2x1
jax: 0.10.0
libtpu: 0.0.40
codegen_flags: <defaults>
</compile_context>

<pallas_src>
import functools

import numpy as np
import jax
import jax.numpy as jnp
from jax import lax
from jax.experimental import pallas as pl
from jax.experimental.pallas import tpu as pltpu

ACT_MODE = "act"
READ_MODE = "read"

_HIDDEN = 512
_NEG = -1e30   # "minus infinity" for masked max (finite, safe)


# ----------------------------------------------------------------------------
# Pallas kernel: fully fused forward head (both output heads in one call)
# ----------------------------------------------------------------------------
def _fused_kernel(num_actions, vocab, seq_len,
                  img_ref, instr_ref, pa_ref,
                  w_img_ref, b_img_ref, e_comb_ref,
                  w1_img_ref, w1_ta_ref, b1_ref,
                  wh_ref, bh_ref,
                  out_act_ref, out_read_ref):
    b = img_ref.shape[0]

    # ---- image encoder: flatten(NCHW) @ W_img + b_img ------------------ MXU
    img_emb = jnp.dot(img_ref[...].astype(jnp.bfloat16), w_img_ref[...],
                      preferred_element_type=jnp.float32) + b_img_ref[...]

    # ---- text mean-pool + action lookup via combined one-hot counts ---------
    # rows [0, vocab) of e_comb hold emb_txt, rows [vocab, vocab+num_prev) hold
    # emb_act (block-diagonal), so a single small matmul yields [txt | act].
    n_comb = e_comb_ref.shape[0]
    ids = instr_ref[...]                                   # (B, seq) int32
    pa = pa_ref[...]                                       # (B, 1)   int32
    iota_c = lax.broadcasted_iota(jnp.int32, (b, n_comb), 1)
    inv_seq = 1.0 / float(seq_len)
    cnt = jnp.zeros((b, n_comb), jnp.float32)
    for s in range(seq_len):                               # tiny static unroll
        cnt = cnt + jnp.where(ids[:, s:s + 1] == iota_c, inv_seq, 0.0)
    cnt = cnt + jnp.where((pa + vocab) == iota_c, 1.0, 0.0)
    ta_emb = jnp.dot(cnt.astype(jnp.bfloat16), e_comb_ref[...],
                     preferred_element_type=jnp.float32)   # (B, txt+act)

    # ---- dense1 + ReLU (image rows / text+action rows of W1, no concat) -----
    h = (jnp.dot(img_emb.astype(jnp.bfloat16), w1_img_ref[...],
                 preferred_element_type=jnp.float32)
         + jnp.dot(ta_emb.astype(jnp.bfloat16), w1_ta_ref[...],
                   preferred_element_type=jnp.float32)
         + b1_ref[...])
    h = jnp.maximum(h, 0.0)

    # ---- both heads: one narrow (512, num_actions+2) weight slab ------------
    logits = jnp.dot(h.astype(jnp.bfloat16), wh_ref[...],
                     preferred_element_type=jnp.float32) + bh_ref[...]

    # ---- per-head log_softmax with a single exp pass -------------------------
    lane = lax.broadcasted_iota(jnp.int32, logits.shape, 1)
    mask_a = lane < num_actions                            # act-head columns
    m_a = jnp.max(jnp.where(mask_a, logits, _NEG), axis=-1, keepdims=True)
    m_r = jnp.max(jnp.where(mask_a, _NEG, logits), axis=-1, keepdims=True)
    m = jnp.where(mask_a, m_a, m_r)
    e = jnp.exp(logits - m)                                # <= 1 everywhere
    s_a = jnp.sum(jnp.where(mask_a, e, 0.0), axis=-1, keepdims=True)
    s_r = jnp.sum(jnp.where(mask_a, 0.0, e), axis=-1, keepdims=True)
    lse = jnp.where(mask_a, jnp.log(s_a), jnp.log(s_r))
    out = logits - m - lse

    out_act_ref[...] = out[:, :num_actions]
    out_read_ref[...] = out[:, num_actions:]


def fused_forward_pallas(img_flat, instr, pa,
                         w_img, b_img, e_comb,
                         w1_img, w1_ta, b1,
                         w_heads, b_heads, *,
                         num_actions, vocab, seq_len):
    """Single fused kernel call -> (act log-probs (B, NA), read log-probs (B, 2))."""
    bp = img_flat.shape[0]
    operands = (img_flat, instr, pa, w_img, b_img, e_comb,
                w1_img, w1_ta, b1, w_heads, b_heads)

    def _nbytes(a):
        return int(np.prod(a.shape)) * jnp.dtype(a.dtype).itemsize

    hid = w1_img.shape[1]
    heads = w_heads.shape[1]
    flops = 2 * bp * (img_flat.shape[1] * w_img.shape[1]
                      + e_comb.shape[0] * e_comb.shape[1]
                      + w1_img.shape[0] * hid
                      + w1_ta.shape[0] * hid
                      + hid * heads)
    bytes_accessed = sum(_nbytes(a) for a in operands) + bp * heads * 4
    transcendentals = bp * (heads + 2)                 # one exp pass + two logs

    vmem = pl.BlockSpec(memory_space=pltpu.MemorySpace.VMEM)
    kernel = functools.partial(_fused_kernel, num_actions, vocab, seq_len)

    return pl.pallas_call(
        kernel,
        out_shape=(jax.ShapeDtypeStruct((bp, num_actions), jnp.float32),
                   jax.ShapeDtypeStruct((bp, 2), jnp.float32)),
        in_specs=[vmem] * len(operands),
        out_specs=(vmem, vmem),
        cost_estimate=pl.CostEstimate(
            flops=flops,
            transcendentals=transcendentals,
            bytes_accessed=bytes_accessed,
        ),
    )(*operands)


# ----------------------------------------------------------------------------
# Plain-JAX glue: deterministic parameter init + module wrapper
# ----------------------------------------------------------------------------
def _linear_init(key, fan_in, fan_out):
    kw, kb = jax.random.split(key)
    scale = 1.0 / jnp.sqrt(jnp.float32(fan_in))
    w = jax.random.uniform(kw, (fan_in, fan_out), jnp.float32, -scale, scale)
    b = jax.random.uniform(kb, (fan_out,), jnp.float32, -scale, scale)
    return w, b


class MultimodalSimpleModuleJAX:
    """JAX/Pallas port of MultimodalSimpleModule (synthetic deterministic weights)."""

    def __init__(self, key, *, img_chw, img_emb, vocab, txt_emb,
                 num_prev_actions, act_emb, num_actions):
        keys = jax.random.split(key, 6)
        C, Hi, Wi = img_chw
        img_in = C * Hi * Wi
        total_emb = img_emb + txt_emb + act_emb
        self.num_actions = num_actions
        self.vocab = vocab

        # --- reference (f32) parameters, mirroring the PyTorch module --------
        self.w_img, self.b_img = _linear_init(keys[0], img_in, img_emb)
        self.emb_txt = 0.02 * jax.random.normal(keys[1], (vocab, txt_emb), jnp.float32)
        self.emb_act = 0.02 * jax.random.normal(keys[2], (num_prev_actions, act_emb),
                                                jnp.float32)
        self.w1, self.b1 = _linear_init(keys[3], total_emb, _HIDDEN)
        self.w2, self.b2 = _linear_init(keys[4], _HIDDEN, num_actions)
        self.w_read, self.b_read = _linear_init(keys[5], _HIDDEN, 2)

        # --- kernel-facing slabs: bf16 weights, f32 biases, no zero padding ---
        self.k_w_img = self.w_img.astype(jnp.bfloat16)                  # (img_in, 32)
        self.k_b_img = self.b_img.reshape(1, img_emb)                   # (1, 32) f32
        # combined block-diagonal embedding table: [emb_txt | 0 ; 0 | emb_act]
        e_comb = jnp.zeros((vocab + num_prev_actions, txt_emb + act_emb), jnp.float32)
        e_comb = e_comb.at[:vocab, :txt_emb].set(self.emb_txt)
        e_comb = e_comb.at[vocab:, txt_emb:].set(self.emb_act)
        self.k_e_comb = e_comb.astype(jnp.bfloat16)                     # (22, 48)
        # dense1 split row-wise: image rows vs (text+action) rows
        self.k_w1_img = self.w1[:img_emb].astype(jnp.bfloat16)          # (32, 512)
        self.k_w1_ta = self.w1[img_emb:].astype(jnp.bfloat16)           # (48, 512)
        self.k_b1 = self.b1.reshape(1, _HIDDEN)                         # (1, 512) f32
        # both heads packed column-wise, exactly num_actions + 2 wide
        self.k_w_heads = jnp.concatenate([self.w2, self.w_read],
                                         axis=1).astype(jnp.bfloat16)   # (512, NA+2)
        self.k_b_heads = jnp.concatenate([self.b2, self.b_read]
                                         ).reshape(1, num_actions + 2)  # f32

        # jit the whole forward so reshape/pad/slice glue fuses into one dispatch
        self.forward_both = jax.jit(self._forward_both)

    # ------------------------------------------------------------ fused kernel
    def _forward_both(self, image, instructions, prev_action):
        B = image.shape[0]
        img_flat = image.reshape(B, -1).astype(jnp.float32)
        instr = instructions.astype(jnp.int32)
        pa = prev_action.astype(jnp.int32).reshape(B, 1)

        bp = ((B + 7) // 8) * 8          # pad batch to the 8-row sublane granule
        if bp != B:
            img_flat = jnp.pad(img_flat, ((0, bp - B), (0, 0)))
            instr = jnp.pad(instr, ((0, bp - B), (0, 0)))
            pa = jnp.pad(pa, ((0, bp - B), (0, 0)))

        out_act, out_read = fused_forward_pallas(
            img_flat, instr, pa,
            self.k_w_img, self.k_b_img, self.k_e_comb,
            self.k_w1_img, self.k_w1_ta, self.k_b1,
            self.k_w_heads, self.k_b_heads,
            num_actions=self.num_actions, vocab=self.vocab,
            seq_len=instructions.shape[1])
        return out_act[:B], out_read[:B]

    def forward(self, image, instructions, prev_action, mode):
        out_act, out_read = self.forward_both(image, instructions, prev_action)
        if mode is None or mode == ACT_MODE:
            return out_act
        elif mode == READ_MODE:
            return out_read
        else:
            raise ValueError("invalid mode for model: %r" % mode)

    # ------------------------------------------------- pure-JAX reference path
    def forward_ref(self, image, instructions, prev_action, mode):
        B = image.shape[0]
        image_emb = image.reshape(B, -1).astype(jnp.float32) @ self.w_img + self.b_img
        text_emb = jnp.mean(self.emb_txt[instructions], axis=1)
        action_emb = self.emb_act[prev_action]
        x = jnp.concatenate([image_emb, text_emb, action_emb], axis=1)
        h = jax.nn.relu(x @ self.w1 + self.b1)
        if mode is None or mode == ACT_MODE:
            logits = h @ self.w2 + self.b2
        else:
            logits = h @ self.w_read + self.b_read
        return jax.nn.log_softmax(logits, axis=1)


# ----------------------------------------------------------------------------
if __name__ == "__main__":
    key = jax.random.PRNGKey(0)
    k_mod, k_img, k_txt, k_act = jax.random.split(key, 4)

    B, C, Hs, Ws = 2, 4, 16, 16
    seq_len, vocab = 8, 16
    num_prev_actions, num_actions = 6, 6

    module = MultimodalSimpleModuleJAX(
        k_mod,
        img_chw=(C, Hs, Ws), img_emb=32,
        vocab=vocab, txt_emb=32,
        num_prev_actions=num_prev_actions, act_emb=16,
        num_actions=num_actions,
    )

    image = jax.random.normal(k_img, (B, C, Hs, Ws), jnp.float32)        # NCHW
    instructions = jax.random.randint(k_txt, (B, seq_len), 0, vocab)      # token ids
    prev_action = jax.random.randint(k_act, (B,), 0, num_prev_actions)    # action ids

    # single fused kernel call producing both heads
    out_act, out_read = module.forward_both(image, instructions, prev_action)
    out_act = jax.block_until_ready(out_act)
    out_read = jax.block_until_ready(out_read)

    # mode-dispatch path (same kernel underneath)
    out_act_m = jax.block_until_ready(
        module.forward(image, instructions, prev_action, ACT_MODE))
    out_read_m = jax.block_until_ready(
        module.forward(image, instructions, prev_action, READ_MODE))

    ref_act = module.forward_ref(image, instructions, prev_action, ACT_MODE)
    ref_read = module.forward_ref(image, instructions, prev_action, READ_MODE)

    assert out_act.shape == (B, num_actions)
    assert out_read.shape == (B, 2)
    # bf16 weights (f32 accumulation) vs f32 reference -> slightly loosened tol
    assert jnp.allclose(out_act, ref_act, atol=3e-2, rtol=3e-2)
    assert jnp.allclose(out_read, ref_read, atol=3e-2, rtol=3e-2)
    assert jnp.allclose(out_act_m, ref_act, atol=3e-2, rtol=3e-2)
    assert jnp.allclose(out_read_m, ref_read, atol=3e-2, rtol=3e-2)

    print("KERNEL_OK")
</pallas_src>

<mosaic_0001>
module attributes {stable_mosaic.version = 11 : i64} {
  func.func @_fused_kernel(%arg0: memref<8x1024xf32, #tpu.memory_space<vmem>>, %arg1: memref<8x8xi32, #tpu.memory_space<vmem>>, %arg2: memref<8x1xi32, #tpu.memory_space<vmem>>, %arg3: memref<1024x32xbf16, #tpu.memory_space<vmem>>, %arg4: memref<1x32xf32, #tpu.memory_space<vmem>>, %arg5: memref<22x48xbf16, #tpu.memory_space<vmem>>, %arg6: memref<32x512xbf16, #tpu.memory_space<vmem>>, %arg7: memref<48x512xbf16, #tpu.memory_space<vmem>>, %arg8: memref<1x512xf32, #tpu.memory_space<vmem>>, %arg9: memref<512x8xbf16, #tpu.memory_space<vmem>>, %arg10: memref<1x8xf32, #tpu.memory_space<vmem>>, %arg11: memref<8x6xf32, #tpu.memory_space<vmem>>, %arg12: memref<8x2xf32, #tpu.memory_space<vmem>>) attributes {dimension_semantics = [], scalar_prefetch = 0 : i64, scratch_operands = 0 : i64, tpu.core_type = #tpu.core_type<tc>} {
    %c0 = arith.constant 0 : index
    %c0_0 = arith.constant 0 : index
    %0 = vector.load %arg0[%c0, %c0_0] : memref<8x1024xf32, #tpu.memory_space<vmem>>, vector<8x1024xf32>
    %1 = arith.truncf %0 : vector<8x1024xf32> to vector<8x1024xbf16>
    %c0_1 = arith.constant 0 : index
    %c0_2 = arith.constant 0 : index
    %2 = vector.load %arg3[%c0_1, %c0_2] : memref<1024x32xbf16, #tpu.memory_space<vmem>>, vector<1024x32xbf16>
    %cst = arith.constant dense<0.000000e+00> : vector<8x32xf32>
    %3 = tpu.matmul %1, %2, %cst {dimension_numbers = #tpu.dot_dimension_numbers<[1], [0], [0], [1], [0, 0, 1, 1], [], []>} : vector<8x1024xbf16>, vector<1024x32xbf16>, vector<8x32xf32> -> vector<8x32xf32>
    %c0_3 = arith.constant 0 : index
    %c0_4 = arith.constant 0 : index
    %4 = vector.load %arg4[%c0_3, %c0_4] : memref<1x32xf32, #tpu.memory_space<vmem>>, vector<1x32xf32>
    %5 = vector.broadcast %4 : vector<1x32xf32> to vector<8x32xf32>
    %6 = arith.addf %3, %5 : vector<8x32xf32>
    %c0_5 = arith.constant 0 : index
    %c0_6 = arith.constant 0 : index
    %7 = vector.load %arg1[%c0_5, %c0_6] : memref<8x8xi32, #tpu.memory_space<vmem>>, vector<8x8xi32>
    %c0_7 = arith.constant 0 : index
    %c0_8 = arith.constant 0 : index
    %8 = vector.load %arg2[%c0_7, %c0_8] : memref<8x1xi32, #tpu.memory_space<vmem>>, vector<8x1xi32>
    %9 = tpu.iota {dimensions = array<i32: 1>} : vector<8x22xi32>
    %cst_9 = arith.constant 0.000000e+00 : f32
    %10 = vector.broadcast %cst_9 : f32 to vector<8x22xf32>
    %11 = vector.extract_strided_slice %7 {offsets = [0, 0], sizes = [8, 1], strides = [1, 1]} : vector<8x8xi32> to vector<8x1xi32>
    %12 = vector.broadcast %11 : vector<8x1xi32> to vector<8x22xi32>
    %13 = arith.cmpi eq, %12, %9 : vector<8x22xi32>
    %cst_10 = arith.constant 1.250000e-01 : f32
    %cst_11 = arith.constant 0.000000e+00 : f32
    %14 = vector.broadcast %cst_10 : f32 to vector<8x22xf32>
    %15 = vector.broadcast %cst_11 : f32 to vector<8x22xf32>
    %16 = arith.select %13, %14, %15 : vector<8x22xi1>, vector<8x22xf32>
    %17 = arith.addf %10, %16 : vector<8x22xf32>
    %18 = vector.extract_strided_slice %7 {offsets = [0, 1], sizes = [8, 1], strides = [1, 1]} : vector<8x8xi32> to vector<8x1xi32>
    %19 = vector.broadcast %18 : vector<8x1xi32> to vector<8x22xi32>
    %20 = arith.cmpi eq, %19, %9 : vector<8x22xi32>
    %cst_12 = arith.constant 1.250000e-01 : f32
    %cst_13 = arith.constant 0.000000e+00 : f32
    %21 = vector.broadcast %cst_12 : f32 to vector<8x22xf32>
    %22 = vector.broadcast %cst_13 : f32 to vector<8x22xf32>
    %23 = arith.select %20, %21, %22 : vector<8x22xi1>, vector<8x22xf32>
    %24 = arith.addf %17, %23 : vector<8x22xf32>
    %25 = vector.extract_strided_slice %7 {offsets = [0, 2], sizes = [8, 1], strides = [1, 1]} : vector<8x8xi32> to vector<8x1xi32>
    %26 = vector.broadcast %25 : vector<8x1xi32> to vector<8x22xi32>
    %27 = arith.cmpi eq, %26, %9 : vector<8x22xi32>
    %cst_14 = arith.constant 1.250000e-01 : f32
    %cst_15 = arith.constant 0.000000e+00 : f32
    %28 = vector.broadcast %cst_14 : f32 to vector<8x22xf32>
    %29 = vector.broadcast %cst_15 : f32 to vector<8x22xf32>
    %30 = arith.select %27, %28, %29 : vector<8x22xi1>, vector<8x22xf32>
    %31 = arith.addf %24, %30 : vector<8x22xf32>
    %32 = vector.extract_strided_slice %7 {offsets = [0, 3], sizes = [8, 1], strides = [1, 1]} : vector<8x8xi32> to vector<8x1xi32>
    %33 = vector.broadcast %32 : vector<8x1xi32> to vector<8x22xi32>
    %34 = arith.cmpi eq, %33, %9 : vector<8x22xi32>
    %cst_16 = arith.constant 1.250000e-01 : f32
    %cst_17 = arith.constant 0.000000e+00 : f32
    %35 = vector.broadcast %cst_16 : f32 to vector<8x22xf32>
    %36 = vector.broadcast %cst_17 : f32 to vector<8x22xf32>
    %37 = arith.select %34, %35, %36 : vector<8x22xi1>, vector<8x22xf32>
    %38 = arith.addf %31, %37 : vector<8x22xf32>
    %39 = vector.extract_strided_slice %7 {offsets = [0, 4], sizes = [8, 1], strides = [1, 1]} : vector<8x8xi32> to vector<8x1xi32>
    %40 = vector.broadcast %39 : vector<8x1xi32> to vector<8x22xi32>
    %41 = arith.cmpi eq, %40, %9 : vector<8x22xi32>
    %cst_18 = arith.constant 1.250000e-01 : f32
    %cst_19 = arith.constant 0.000000e+00 : f32
    %42 = vector.broadcast %cst_18 : f32 to vector<8x22xf32>
    %43 = vector.broadcast %cst_19 : f32 to vector<8x22xf32>
    %44 = arith.select %41, %42, %43 : vector<8x22xi1>, vector<8x22xf32>
    %45 = arith.addf %38, %44 : vector<8x22xf32>
    %46 = vector.extract_strided_slice %7 {offsets = [0, 5], sizes = [8, 1], strides = [1, 1]} : vector<8x8xi32> to vector<8x1xi32>
    %47 = vector.broadcast %46 : vector<8x1xi32> to vector<8x22xi32>
    %48 = arith.cmpi eq, %47, %9 : vector<8x22xi32>
    %cst_20 = arith.constant 1.250000e-01 : f32
    %cst_21 = arith.constant 0.000000e+00 : f32
    %49 = vector.broadcast %cst_20 : f32 to vector<8x22xf32>
    %50 = vector.broadcast %cst_21 : f32 to vector<8x22xf32>
    %51 = arith.select %48, %49, %50 : vector<8x22xi1>, vector<8x22xf32>
    %52 = arith.addf %45, %51 : vector<8x22xf32>
    %53 = vector.extract_strided_slice %7 {offsets = [0, 6], sizes = [8, 1], strides = [1, 1]} : vector<8x8xi32> to vector<8x1xi32>
    %54 = vector.broadcast %53 : vector<8x1xi32> to vector<8x22xi32>
    %55 = arith.cmpi eq, %54, %9 : vector<8x22xi32>
    %cst_22 = arith.constant 1.250000e-01 : f32
    %cst_23 = arith.constant 0.000000e+00 : f32
    %56 = vector.broadcast %cst_22 : f32 to vector<8x22xf32>
    %57 = vector.broadcast %cst_23 : f32 to vector<8x22xf32>
    %58 = arith.select %55, %56, %57 : vector<8x22xi1>, vector<8x22xf32>
    %59 = arith.addf %52, %58 : vector<8x22xf32>
    %60 = vector.extract_strided_slice %7 {offsets = [0, 7], sizes = [8, 1], strides = [1, 1]} : vector<8x8xi32> to vector<8x1xi32>
    %61 = vector.broadcast %60 : vector<8x1xi32> to vector<8x22xi32>
    %62 = arith.cmpi eq, %61, %9 : vector<8x22xi32>
    %cst_24 = arith.constant 1.250000e-01 : f32
    %cst_25 = arith.constant 0.000000e+00 : f32
    %63 = vector.broadcast %cst_24 : f32 to vector<8x22xf32>
    %64 = vector.broadcast %cst_25 : f32 to vector<8x22xf32>
    %65 = arith.select %62, %63, %64 : vector<8x22xi1>, vector<8x22xf32>
    %66 = arith.addf %59, %65 : vector<8x22xf32>
    %c16_i32 = arith.constant 16 : i32
    %67 = vector.broadcast %c16_i32 : i32 to vector<8x1xi32>
    %68 = arith.addi %8, %67 : vector<8x1xi32>
    %69 = vector.broadcast %68 : vector<8x1xi32> to vector<8x22xi32>
    %70 = arith.cmpi eq, %69, %9 : vector<8x22xi32>
    %cst_26 = arith.constant 1.000000e+00 : f32
    %cst_27 = arith.constant 0.000000e+00 : f32
    %71 = vector.broadcast %cst_26 : f32 to vector<8x22xf32>
    %72 = vector.broadcast %cst_27 : f32 to vector<8x22xf32>
    %73 = arith.select %70, %71, %72 : vector<8x22xi1>, vector<8x22xf32>
    %74 = arith.addf %66, %73 : vector<8x22xf32>
    %75 = arith.truncf %74 : vector<8x22xf32> to vector<8x22xbf16>
    %c0_28 = arith.constant 0 : index
    %c0_29 = arith.constant 0 : index
    %76 = vector.load %arg5[%c0_28, %c0_29] : memref<22x48xbf16, #tpu.memory_space<vmem>>, vector<22x48xbf16>
    %cst_30 = arith.constant dense<0.000000e+00> : vector<8x48xf32>
    %77 = tpu.matmul %75, %76, %cst_30 {dimension_numbers = #tpu.dot_dimension_numbers<[1], [0], [0], [1], [0, 0, 1, 1], [], []>} : vector<8x22xbf16>, vector<22x48xbf16>, vector<8x48xf32> -> vector<8x48xf32>
    %78 = arith.truncf %6 : vector<8x32xf32> to vector<8x32xbf16>
    %c0_31 = arith.constant 0 : index
    %c0_32 = arith.constant 0 : index
    %79 = vector.load %arg6[%c0_31, %c0_32] : memref<32x512xbf16, #tpu.memory_space<vmem>>, vector<32x512xbf16>
    %cst_33 = arith.constant dense<0.000000e+00> : vector<8x512xf32>
    %80 = tpu.matmul %78, %79, %cst_33 {dimension_numbers = #tpu.dot_dimension_numbers<[1], [0], [0], [1], [0, 0, 1, 1], [], []>} : vector<8x32xbf16>, vector<32x512xbf16>, vector<8x512xf32> -> vector<8x512xf32>
    %81 = arith.truncf %77 : vector<8x48xf32> to vector<8x48xbf16>
    %c0_34 = arith.constant 0 : index
    %c0_35 = arith.constant 0 : index
    %82 = vector.load %arg7[%c0_34, %c0_35] : memref<48x512xbf16, #tpu.memory_space<vmem>>, vector<48x512xbf16>
    %cst_36 = arith.constant dense<0.000000e+00> : vector<8x512xf32>
    %83 = tpu.matmul %81, %82, %cst_36 {dimension_numbers = #tpu.dot_dimension_numbers<[1], [0], [0], [1], [0, 0, 1, 1], [], []>} : vector<8x48xbf16>, vector<48x512xbf16>, vector<8x512xf32> -> vector<8x512xf32>
    %84 = arith.addf %80, %83 : vector<8x512xf32>
    %c0_37 = arith.constant 0 : index
    %c0_38 = arith.constant 0 : index
    %85 = vector.load %arg8[%c0_37, %c0_38] : memref<1x512xf32, #tpu.memory_space<vmem>>, vector<1x512xf32>
    %86 = vector.broadcast %85 : vector<1x512xf32> to vector<8x512xf32>
    %87 = arith.addf %84, %86 : vector<8x512xf32>
    %cst_39 = arith.constant 0.000000e+00 : f32
    %88 = vector.broadcast %cst_39 : f32 to vector<8x512xf32>
    %89 = arith.maximumf %87, %88 : vector<8x512xf32>
    %90 = arith.truncf %89 : vector<8x512xf32> to vector<8x512xbf16>
    %c0_40 = arith.constant 0 : index
    %c0_41 = arith.constant 0 : index
    %91 = vector.load %arg9[%c0_40, %c0_41] : memref<512x8xbf16, #tpu.memory_space<vmem>>, vector<512x8xbf16>
    %cst_42 = arith.constant dense<0.000000e+00> : vector<8x8xf32>
    %92 = tpu.matmul %90, %91, %cst_42 {dimension_numbers = #tpu.dot_dimension_numbers<[1], [0], [0], [1], [0, 0, 1, 1], [], []>} : vector<8x512xbf16>, vector<512x8xbf16>, vector<8x8xf32> -> vector<8x8xf32>
    %c0_43 = arith.constant 0 : index
    %c0_44 = arith.constant 0 : index
    %93 = vector.load %arg10[%c0_43, %c0_44] : memref<1x8xf32, #tpu.memory_space<vmem>>, vector<1x8xf32>
    %94 = vector.broadcast %93 : vector<1x8xf32> to vector<8x8xf32>
    %95 = arith.addf %92, %94 : vector<8x8xf32>
    %96 = tpu.iota {dimensions = array<i32: 1>} : vector<8x8xi32>
    %c6_i32 = arith.constant 6 : i32
    %97 = vector.broadcast %c6_i32 : i32 to vector<8x8xi32>
    %98 = arith.cmpi slt, %96, %97 : vector<8x8xi32>
    %cst_45 = arith.constant -1.000000e+30 : f32
    %99 = vector.broadcast %cst_45 : f32 to vector<8x8xf32>
    %100 = arith.select %98, %95, %99 : vector<8x8xi1>, vector<8x8xf32>
    %cst_46 = arith.constant dense<0xFF800000> : vector<8xf32>
    %101 = vector.multi_reduction <maximumf>, %100, %cst_46 [1] : vector<8x8xf32> to vector<8xf32>
    %102 = vector.shape_cast %101 : vector<8xf32> to vector<8x1xf32>
    %cst_47 = arith.constant -1.000000e+30 : f32
    %103 = vector.broadcast %cst_47 : f32 to vector<8x8xf32>
    %104 = arith.select %98, %103, %95 : vector<8x8xi1>, vector<8x8xf32>
    %cst_48 = arith.constant dense<0xFF800000> : vector<8xf32>
    %105 = vector.multi_reduction <maximumf>, %104, %cst_48 [1] : vector<8x8xf32> to vector<8xf32>
    %106 = vector.shape_cast %105 : vector<8xf32> to vector<8x1xf32>
    %107 = vector.shape_cast %102 : vector<8x1xf32> to vector<8x1xf32>
    %108 = vector.broadcast %107 : vector<8x1xf32> to vector<8x8xf32>
    %109 = vector.shape_cast %106 : vector<8x1xf32> to vector<8x1xf32>
    %110 = vector.broadcast %109 : vector<8x1xf32> to vector<8x8xf32>
    %111 = arith.select %98, %108, %110 : vector<8x8xi1>, vector<8x8xf32>
    %112 = arith.subf %95, %111 : vector<8x8xf32>
    %113 = math.exp %112 : vector<8x8xf32>
    %cst_49 = arith.constant 0.000000e+00 : f32
    %114 = vector.broadcast %cst_49 : f32 to vector<8x8xf32>
    %115 = arith.select %98, %113, %114 : vector<8x8xi1>, vector<8x8xf32>
    %cst_50 = arith.constant dense<0.000000e+00> : vector<8xf32>
    %116 = vector.multi_reduction <add>, %115, %cst_50 [1] : vector<8x8xf32> to vector<8xf32>
    %117 = vector.shape_cast %116 : vector<8xf32> to vector<8x1xf32>
    %cst_51 = arith.constant 0.000000e+00 : f32
    %118 = vector.broadcast %cst_51 : f32 to vector<8x8xf32>
    %119 = arith.select %98, %118, %113 : vector<8x8xi1>, vector<8x8xf32>
    %cst_52 = arith.constant dense<0.000000e+00> : vector<8xf32>
    %120 = vector.multi_reduction <add>, %119, %cst_52 [1] : vector<8x8xf32> to vector<8xf32>
    %121 = vector.shape_cast %120 : vector<8xf32> to vector<8x1xf32>
    %122 = math.log %117 : vector<8x1xf32>
    %123 = math.log %121 : vector<8x1xf32>
    %124 = vector.shape_cast %122 : vector<8x1xf32> to vector<8x1xf32>
    %125 = vector.broadcast %124 : vector<8x1xf32> to vector<8x8xf32>
    %126 = vector.shape_cast %123 : vector<8x1xf32> to vector<8x1xf32>
    %127 = vector.broadcast %126 : vector<8x1xf32> to vector<8x8xf32>
    %128 = arith.select %98, %125, %127 : vector<8x8xi1>, vector<8x8xf32>
    %129 = arith.subf %95, %111 : vector<8x8xf32>
    %130 = arith.subf %129, %128 : vector<8x8xf32>
    %131 = vector.extract_strided_slice %130 {offsets = [0, 0], sizes = [8, 6], strides = [1, 1]} : vector<8x8xf32> to vector<8x6xf32>
    %c0_53 = arith.constant 0 : index
    %c0_54 = arith.constant 0 : index
    %132 = vector.load %arg11[%c0_53, %c0_54] : memref<8x6xf32, #tpu.memory_space<vmem>>, vector<8x6xf32>
    tpu.vector_store %arg11[%c0_53, %c0_54], %131 {strides = array<i32>} : memref<8x6xf32, #tpu.memory_space<vmem>>, vector<8x6xf32>,
    %133 = vector.extract_strided_slice %130 {offsets = [0, 6], sizes = [8, 2], strides = [1, 1]} : vector<8x8xf32> to vector<8x2xf32>
    %c0_55 = arith.constant 0 : index
    %c0_56 = arith.constant 0 : index
    %134 = vector.load %arg12[%c0_55, %c0_56] : memref<8x2xf32, #tpu.memory_space<vmem>>, vector<8x2xf32>
    tpu.vector_store %arg12[%c0_55, %c0_56], %133 {strides = array<i32>} : memref<8x2xf32, #tpu.memory_space<vmem>>, vector<8x2xf32>,
    return
  }
}

</mosaic_0001>

<llo_original>
// kernel: _forward_both.1
$region0: #{_forward_both.1}
  #allocation0 [shape = 'u32[]', space=smem, size = 0x4, offset = 0x4, fixed_abs, tag = 'smem constant byte address 0x4 - core index']
  #allocation1 [shape = 'u32[144,128]{1,0:T(1,128)}', space=vmem, size = 0x12000, scoped, tag = 'internal scratch']
  %s0 = inlined_call_operand.vmem [shape: f32[8,1024], index: 0, kind: input, shape index: {}]
  %s1 = inlined_call_operand.vmem [shape: s32[8,8], index: 1, kind: input, shape index: {}]
  %s2 = inlined_call_operand.vmem [shape: s32[8,1], index: 2, kind: input, shape index: {}]
  %s3 = inlined_call_operand.vmem [shape: bf16[1024,32], index: 3, kind: input, shape index: {}]
  %s4 = inlined_call_operand.vmem [shape: f32[1,32], index: 4, kind: input, shape index: {}]
  %s5 = inlined_call_operand.vmem [shape: bf16[22,48], index: 5, kind: input, shape index: {}]
  %s6 = inlined_call_operand.vmem [shape: bf16[32,512], index: 6, kind: input, shape index: {}]
  %s7 = inlined_call_operand.vmem [shape: bf16[48,512], index: 7, kind: input, shape index: {}]
  %s8 = inlined_call_operand.vmem [shape: f32[1,512], index: 8, kind: input, shape index: {}]
  %s9 = inlined_call_operand.hbm [shape: bf16[512,8], index: 9, kind: input, shape index: {}]
  %s10 = inlined_call_operand.vmem [shape: f32[1,8], index: 10, kind: input, shape index: {}]
  %s11 = inlined_call_operand.vmem [shape: f32[8,6], index: 11, kind: output, shape index: {0}]
  %s12 = inlined_call_operand.vmem [shape: f32[8,2], index: 12, kind: output, shape index: {1}]
  %13 = xla_tuple %s11, %s12
  %s14 = sld [smem:[#allocation0]]
  $region66: #{_forward_both.1} parent=0
    _
  %s16 = ssub.s32 1, %s14
  %s17 = scalar_select 0, %s16, %s14
  $region1: #{_forward_both.1} parent=0
    #allocation2 [shape = 'u8[131072]{0}', space=vmem, size = 0x20000, scoped, tag = 'input window, operand 9, single buffered']
    #allocation3 [shape = 's32[1]{0}', space=sflag, size = 0x4, scoped, tag = 'scoped memory for _forward_both.1']
    %18 = vsyncpa [#allocation3], 0
    // Predicated region
    $region2: #{_forward_both.1} parent=1 // pred_check
      _
    $region3: #{_forward_both.1} parent=1 // pred_check_branch
      %20 = sbr.rel (0) target = $region5
    $region4: #{_forward_both.1} parent=1 // pred_region
      _
    $region5: #{_forward_both.1} parent=1 // pred_fallthru
      _
    // Predicated region
    $region6: #{_forward_both.1} parent=1 // pred_check
      _
    $region7: #{_forward_both.1} parent=1 // pred_check_branch
      %22 = sbr.rel (0) target = $region9
    $region8: #{_forward_both.1} parent=1 // pred_region
      _
    $region9: #{_forward_both.1} parent=1 // pred_fallthru
      _
    // Predicated region
    $region10: #{_forward_both.1} parent=1 // pred_check
      _
    $region11: #{_forward_both.1} parent=1 // pred_check_branch
      %24 = sbr.rel (0) target = $region13
    $region12: #{_forward_both.1} parent=1 // pred_region
      _
    $region13: #{_forward_both.1} parent=1 // pred_fallthru
      _
    // Predicated region
    $region14: #{_forward_both.1} parent=1 // pred_check
      _
    $region15: #{_forward_both.1} parent=1 // pred_check_branch
      %26 = sbr.rel (0) target = $region17
    $region16: #{_forward_both.1} parent=1 // pred_region
      _
    $region17: #{_forward_both.1} parent=1 // pred_fallthru
      _
    // Predicated region
    $region18: #{_forward_both.1} parent=1 // pred_check
      _
    $region19: #{_forward_both.1} parent=1 // pred_check_branch
      %28 = sbr.rel (0) target = $region21
    $region20: #{_forward_both.1} parent=1 // pred_region
      _
    $region21: #{_forward_both.1} parent=1 // pred_fallthru
      _
    // Predicated region
    $region22: #{_forward_both.1} parent=1 // pred_check
      _
    $region23: #{_forward_both.1} parent=1 // pred_check_branch
      %30 = sbr.rel (0) target = $region25
    $region24: #{_forward_both.1} parent=1 // pred_region
      _
    $region25: #{_forward_both.1} parent=1 // pred_fallthru
      _
    // Predicated region
    $region26: #{_forward_both.1} parent=1 // pred_check
      _
    $region27: #{_forward_both.1} parent=1 // pred_check_branch
      %32 = sbr.rel (0) target = $region29
    $region28: #{_forward_both.1} parent=1 // pred_region
      _
    $region29: #{_forward_both.1} parent=1 // pred_fallthru
      _
    // Predicated region
    $region30: #{_forward_both.1} parent=1 // pred_check
      _
    $region31: #{_forward_both.1} parent=1 // pred_check_branch
      %34 = sbr.rel (0) target = $region33
    $region32: #{_forward_both.1} parent=1 // pred_region
      _
    $region33: #{_forward_both.1} parent=1 // pred_fallthru
      _
    // Predicated region
    $region34: #{_forward_both.1} parent=1 // pred_check
      _
    $region35: #{_forward_both.1} parent=1 // pred_check_branch
      %36 = sbr.rel (0) target = $region37
    $region36: #{_forward_both.1} parent=1 // pred_region
      _
    $region37: #{_forward_both.1} parent=1 // pred_fallthru
      _
    // Predicated region
    $region38: #{_forward_both.1} parent=1 // pred_check
      _
    $region39: #{_forward_both.1} parent=1 // pred_check_branch
      %38 = sbr.rel (0) target = $region41
    $region40: #{_forward_both.1} parent=1 // pred_region
      %s40 = ssub.s32 4096, 4096
      %41 = vsyncadd [#allocation3], %s40
      %s42 = sshll.u32 [#allocation2], 4
      %s43 = int_to_ptr.vmem [resolvable:$true] %s42
      %48 = dma.hbm_to_vmem [thread:$0]  %s9, 4096, %s43, [#allocation3], 64, 64, 4
    $region41: #{_forward_both.1} parent=1 // pred_fallthru
      _
    // Predicated region
    $region42: #{_forward_both.1} parent=1 // pred_check
      _
    $region43: #{_forward_both.1} parent=1 // pred_check_branch
      %50 = sbr.rel (0) target = $region45
    $region44: #{_forward_both.1} parent=1 // pred_region
      _
    $region45: #{_forward_both.1} parent=1 // pred_fallthru
      _
    // Predicated region
    $region46: #{_forward_both.1} parent=1 // pred_check
      _
    $region47: #{_forward_both.1} parent=1 // pred_check_branch
      %52 = sbr.rel (0) target = $region49
    $region48: #{_forward_both.1} parent=1 // pred_region
      %53 = dma.done [#allocation3], 4096
    $region49: #{_forward_both.1} parent=1 // pred_fallthru
      _
    %v55 = vld [vmem:[%s0] sm:$0xff]
    %v56 = vld [vmem:[%s0 + $0x8] sm:$0xff]
    %v57 = vld [vmem:[%s0 + $0x10] sm:$0xff]
    %v58 = vld [vmem:[%s0 + $0x18] sm:$0xff]
    %v59 = vld [vmem:[%s0 + $0x20] sm:$0xff]
    %v60 = vld [vmem:[%s0 + $0x28] sm:$0xff]
    %v61 = vld [vmem:[%s0 + $0x30] sm:$0xff]
    %v62 = vld [vmem:[%s0 + $0x38] sm:$0xff]
    %v63 = vpack.c.bf16 %v55, %v55
    %v64 = vpack.c.bf16 %v56, %v56
    %v65 = vpack.c.bf16 %v57, %v57
    %v66 = vpack.c.bf16 %v58, %v58
    %v67 = vpack.c.bf16 %v59, %v59
    %v68 = vpack.c.bf16 %v60, %v60
    %v69 = vpack.c.bf16 %v61, %v61
    %v70 = vpack.c.bf16 %v62, %v62
    %v71 = vld [vmem:[%s3] sm:$0xf]
    %v72 = vld [vmem:[%s3 + $0x4] sm:$0xf]
    %v73 = vld [vmem:[%s3 + $0x8] sm:$0xf]
    %v74 = vld [vmem:[%s3 + $0xc] sm:$0xf]
    %v75 = vld [vmem:[%s3 + $0x10] sm:$0xf]
    %v76 = vld [vmem:[%s3 + $0x14] sm:$0xf]
    %v77 = vld [vmem:[%s3 + $0x18] sm:$0xf]
    %v78 = vld [vmem:[%s3 + $0x1c] sm:$0xf]
    %v79 = vld [vmem:[%s3 + $0x20] sm:$0xf]
    %v80 = vld [vmem:[%s3 + $0x24] sm:$0xf]
    %v81 = vld [vmem:[%s3 + $0x28] sm:$0xf]
    %v82 = vld [vmem:[%s3 + $0x2c] sm:$0xf]
    %v83 = vld [vmem:[%s3 + $0x30] sm:$0xf]
    %v84 = vld [vmem:[%s3 + $0x34] sm:$0xf]
    %v85 = vld [vmem:[%s3 + $0x38] sm:$0xf]
    %v86 = vld [vmem:[%s3 + $0x3c] sm:$0xf]
    %v87 = vld [vmem:[%s3 + $0x40] sm:$0xf]
    %v88 = vld [vmem:[%s3 + $0x44] sm:$0xf]
    %v89 = vld [vmem:[%s3 + $0x48] sm:$0xf]
    %v90 = vld [vmem:[%s3 + $0x4c] sm:$0xf]
    %v91 = vld [vmem:[%s3 + $0x50] sm:$0xf]
    %v92 = vld [vmem:[%s3 + $0x54] sm:$0xf]
    %v93 = vld [vmem:[%s3 + $0x58] sm:$0xf]
    %v94 = vld [vmem:[%s3 + $0x5c] sm:$0xf]
    %v95 = vld [vmem:[%s3 + $0x60] sm:$0xf]
    %v96 = vld [vmem:[%s3 + $0x64] sm:$0xf]
    %v97 = vld [vmem:[%s3 + $0x68] sm:$0xf]
    %v98 = vld [vmem:[%s3 + $0x6c] sm:$0xf]
    %v99 = vld [vmem:[%s3 + $0x70] sm:$0xf]
    %v100 = vld [vmem:[%s3 + $0x74] sm:$0xf]
    %v101 = vld [vmem:[%s3 + $0x78] sm:$0xf]
    %v102 = vld [vmem:[%s3 + $0x7c] sm:$0xf]
    %v103 = vld [vmem:[%s3 + $0x80] sm:$0xf]
    %v104 = vld [vmem:[%s3 + $0x84] sm:$0xf]
    %v105 = vld [vmem:[%s3 + $0x88] sm:$0xf]
    %v106 = vld [vmem:[%s3 + $0x8c] sm:$0xf]
    %v107 = vld [vmem:[%s3 + $0x90] sm:$0xf]
    %v108 = vld [vmem:[%s3 + $0x94] sm:$0xf]
    %v109 = vld [vmem:[%s3 + $0x98] sm:$0xf]
    %v110 = vld [vmem:[%s3 + $0x9c] sm:$0xf]
    %v111 = vld [vmem:[%s3 + $0xa0] sm:$0xf]
    %v112 = vld [vmem:[%s3 + $0xa4] sm:$0xf]
    %v113 = vld [vmem:[%s3 + $0xa8] sm:$0xf]
    %v114 = vld [vmem:[%s3 + $0xac] sm:$0xf]
    %v115 = vld [vmem:[%s3 + $0xb0] sm:$0xf]
    %v116 = vld [vmem:[%s3 + $0xb4] sm:$0xf]
    %v117 = vld [vmem:[%s3 + $0xb8] sm:$0xf]
    %v118 = vld [vmem:[%s3 + $0xbc] sm:$0xf]
    %v119 = vld [vmem:[%s3 + $0xc0] sm:$0xf]
    %v120 = vld [vmem:[%s3 + $0xc4] sm:$0xf]
    %v121 = vld [vmem:[%s3 + $0xc8] sm:$0xf]
    %v122 = vld [vmem:[%s3 + $0xcc] sm:$0xf]
    %v123 = vld [vmem:[%s3 + $0xd0] sm:$0xf]
    %v124 = vld [vmem:[%s3 + $0xd4] sm:$0xf]
    %v125 = vld [vmem:[%s3 + $0xd8] sm:$0xf]
    %v126 = vld [vmem:[%s3 + $0xdc] sm:$0xf]
    %v127 = vld [vmem:[%s3 + $0xe0] sm:$0xf]
    %v128 = vld [vmem:[%s3 + $0xe4] sm:$0xf]
    %v129 = vld [vmem:[%s3 + $0xe8] sm:$0xf]
    %v130 = vld [vmem:[%s3 + $0xec] sm:$0xf]
    %v131 = vld [vmem:[%s3 + $0xf0] sm:$0xf]
    %v132 = vld [vmem:[%s3 + $0xf4] sm:$0xf]
    %v133 = vld [vmem:[%s3 + $0xf8] sm:$0xf]
    %v134 = vld [vmem:[%s3 + $0xfc] sm:$0xf]
    %v135 = vld [vmem:[%s3 + $0x100] sm:$0xf]
    %v136 = vld [vmem:[%s3 + $0x104] sm:$0xf]
    %v137 = vld [vmem:[%s3 + $0x108] sm:$0xf]
    %v138 = vld [vmem:[%s3 + $0x10c] sm:$0xf]
    %v139 = vld [vmem:[%s3 + $0x110] sm:$0xf]
    %v140 = vld [vmem:[%s3 + $0x114] sm:$0xf]
    %v141 = vld [vmem:[%s3 + $0x118] sm:$0xf]
    %v142 = vld [vmem:[%s3 + $0x11c] sm:$0xf]
    %v143 = vld [vmem:[%s3 + $0x120] sm:$0xf]
    %v144 = vld [vmem:[%s3 + $0x124] sm:$0xf]
    %v145 = vld [vmem:[%s3 + $0x128] sm:$0xf]
    %v146 = vld [vmem:[%s3 + $0x12c] sm:$0xf]
    %v147 = vld [vmem:[%s3 + $0x130] sm:$0xf]
    %v148 = vld [vmem:[%s3 + $0x134] sm:$0xf]
    %v149 = vld [vmem:[%s3 + $0x138] sm:$0xf]
    %v150 = vld [vmem:[%s3 + $0x13c] sm:$0xf]
    %v151 = vld [vmem:[%s3 + $0x140] sm:$0xf]
    %v152 = vld [vmem:[%s3 + $0x144] sm:$0xf]
    %v153 = vld [vmem:[%s3 + $0x148] sm:$0xf]
    %v154 = vld [vmem:[%s3 + $0x14c] sm:$0xf]
    %v155 = vld [vmem:[%s3 + $0x150] sm:$0xf]
    %v156 = vld [vmem:[%s3 + $0x154] sm:$0xf]
    %v157 = vld [vmem:[%s3 + $0x158] sm:$0xf]
    %v158 = vld [vmem:[%s3 + $0x15c] sm:$0xf]
    %v159 = vld [vmem:[%s3 + $0x160] sm:$0xf]
    %v160 = vld [vmem:[%s3 + $0x164] sm:$0xf]
    %v161 = vld [vmem:[%s3 + $0x168] sm:$0xf]
    %v162 = vld [vmem:[%s3 + $0x16c] sm:$0xf]
    %v163 = vld [vmem:[%s3 + $0x170] sm:$0xf]
    %v164 = vld [vmem:[%s3 + $0x174] sm:$0xf]
    %v165 = vld [vmem:[%s3 + $0x178] sm:$0xf]
    %v166 = vld [vmem:[%s3 + $0x17c] sm:$0xf]
    %v167 = vld [vmem:[%s3 + $0x180] sm:$0xf]
    %v168 = vld [vmem:[%s3 + $0x184] sm:$0xf]
    %v169 = vld [vmem:[%s3 + $0x188] sm:$0xf]
    %v170 = vld [vmem:[%s3 + $0x18c] sm:$0xf]
    %v171 = vld [vmem:[%s3 + $0x190] sm:$0xf]
    %v172 = vld [vmem:[%s3 + $0x194] sm:$0xf]
    %v173 = vld [vmem:[%s3 + $0x198] sm:$0xf]
    %v174 = vld [vmem:[%s3 + $0x19c] sm:$0xf]
    %v175 = vld [vmem:[%s3 + $0x1a0] sm:$0xf]
    %v176 = vld [vmem:[%s3 + $0x1a4] sm:$0xf]
    %v177 = vld [vmem:[%s3 + $0x1a8] sm:$0xf]
    %v178 = vld [vmem:[%s3 + $0x1ac] sm:$0xf]
    %v179 = vld [vmem:[%s3 + $0x1b0] sm:$0xf]
    %v180 = vld [vmem:[%s3 + $0x1b4] sm:$0xf]
    %v181 = vld [vmem:[%s3 + $0x1b8] sm:$0xf]
    %v182 = vld [vmem:[%s3 + $0x1bc] sm:$0xf]
    %v183 = vld [vmem:[%s3 + $0x1c0] sm:$0xf]
    %v184 = vld [vmem:[%s3 + $0x1c4] sm:$0xf]
    %v185 = vld [vmem:[%s3 + $0x1c8] sm:$0xf]
    %v186 = vld [vmem:[%s3 + $0x1cc] sm:$0xf]
    %v187 = vld [vmem:[%s3 + $0x1d0] sm:$0xf]
    %v188 = vld [vmem:[%s3 + $0x1d4] sm:$0xf]
    %v189 = vld [vmem:[%s3 + $0x1d8] sm:$0xf]
    %v190 = vld [vmem:[%s3 + $0x1dc] sm:$0xf]
    %v191 = vld [vmem:[%s3 + $0x1e0] sm:$0xf]
    %v192 = vld [vmem:[%s3 + $0x1e4] sm:$0xf]
    %v193 = vld [vmem:[%s3 + $0x1e8] sm:$0xf]
    %v194 = vld [vmem:[%s3 + $0x1ec] sm:$0xf]
    %v195 = vld [vmem:[%s3 + $0x1f0] sm:$0xf]
    %v196 = vld [vmem:[%s3 + $0x1f4] sm:$0xf]
    %v197 = vld [vmem:[%s3 + $0x1f8] sm:$0xf]
    %v198 = vld [vmem:[%s3 + $0x1fc] sm:$0xf]
    %v199 = vld [vmem:[%s4] sm:$0x1]
    %v201 = vlaneseq
    %v202 = vshrl.u32 %v201, 7
    %v203 = vsub.s32 0, %v202
    %v204 = vrot.slane %v199, %v203
    %v334 = vunpack.c.l.b16 %v71
    %v335 = vunpack.c.l.b16 %v72
    %v336 = vunpack.c.l.b16 %v73
    %v337 = vunpack.c.l.b16 %v74
    %v338 = vunpack.c.l.b16 %v75
    %v339 = vunpack.c.l.b16 %v76
    %v340 = vunpack.c.l.b16 %v77
    %v341 = vunpack.c.l.b16 %v78
    %v342 = vunpack.c.l.b16 %v79
    %v343 = vunpack.c.l.b16 %v80
    %v344 = vunpack.c.l.b16 %v81
    %v345 = vunpack.c.l.b16 %v82
    %v346 = vunpack.c.l.b16 %v83
    %v347 = vunpack.c.l.b16 %v84
    %v348 = vunpack.c.l.b16 %v85
    %v349 = vunpack.c.l.b16 %v86
    %v350 = vunpack.c.l.b16 %v87
    %v351 = vunpack.c.l.b16 %v88
    %v352 = vunpack.c.l.b16 %v89
    %v353 = vunpack.c.l.b16 %v90
    %v354 = vunpack.c.l.b16 %v91
    %v355 = vunpack.c.l.b16 %v92
    %v356 = vunpack.c.l.b16 %v93
    %v357 = vunpack.c.l.b16 %v94
    %v358 = vunpack.c.l.b16 %v95
    %v359 = vunpack.c.l.b16 %v96
    %v360 = vunpack.c.l.b16 %v97
    %v361 = vunpack.c.l.b16 %v98
    %v362 = vunpack.c.l.b16 %v99
    %v363 = vunpack.c.l.b16 %v100
    %v364 = vunpack.c.l.b16 %v101
    %v365 = vunpack.c.l.b16 %v102
    %v366 = vunpack.c.l.b16 %v103
    %v367 = vunpack.c.l.b16 %v104
    %v368 = vunpack.c.l.b16 %v105
    %v369 = vunpack.c.l.b16 %v106
    %v370 = vunpack.c.l.b16 %v107
    %v371 = vunpack.c.l.b16 %v108
    %v372 = vunpack.c.l.b16 %v109
    %v373 = vunpack.c.l.b16 %v110
    %v374 = vunpack.c.l.b16 %v111
    %v375 = vunpack.c.l.b16 %v112
    %v376 = vunpack.c.l.b16 %v113
    %v377 = vunpack.c.l.b16 %v114
    %v378 = vunpack.c.l.b16 %v115
    %v379 = vunpack.c.l.b16 %v116
    %v380 = vunpack.c.l.b16 %v117
    %v381 = vunpack.c.l.b16 %v118
    %v382 = vunpack.c.l.b16 %v119
    %v383 = vunpack.c.l.b16 %v120
    %v384 = vunpack.c.l.b16 %v121
    %v385 = vunpack.c.l.b16 %v122
    %v386 = vunpack.c.l.b16 %v123
    %v387 = vunpack.c.l.b16 %v124
    %v388 = vunpack.c.l.b16 %v125
    %v389 = vunpack.c.l.b16 %v126
    %v390 = vunpack.c.l.b16 %v127
    %v391 = vunpack.c.l.b16 %v128
    %v392 = vunpack.c.l.b16 %v129
    %v393 = vunpack.c.l.b16 %v130
    %v394 = vunpack.c.l.b16 %v131
    %v395 = vunpack.c.l.b16 %v132
    %v396 = vunpack.c.l.b16 %v133
    %v397 = vunpack.c.l.b16 %v134
    %v398 = vunpack.c.l.b16 %v135
    %v399 = vunpack.c.l.b16 %v136
    %v400 = vunpack.c.l.b16 %v137
    %v401 = vunpack.c.l.b16 %v138
    %v402 = vunpack.c.l.b16 %v139
    %v403 = vunpack.c.l.b16 %v140
    %v404 = vunpack.c.l.b16 %v141
    %v405 = vunpack.c.l.b16 %v142
    %v406 = vunpack.c.l.b16 %v143
    %v407 = vunpack.c.l.b16 %v144
    %v408 = vunpack.c.l.b16 %v145
    %v409 = vunpack.c.l.b16 %v146
    %v410 = vunpack.c.l.b16 %v147
    %v411 = vunpack.c.l.b16 %v148
    %v412 = vunpack.c.l.b16 %v149
    %v413 = vunpack.c.l.b16 %v150
    %v414 = vunpack.c.l.b16 %v151
    %v415 = vunpack.c.l.b16 %v152
    %v416 = vunpack.c.l.b16 %v153
    %v417 = vunpack.c.l.b16 %v154
    %v418 = vunpack.c.l.b16 %v155
    %v419 = vunpack.c.l.b16 %v156
    %v420 = vunpack.c.l.b16 %v157
    %v421 = vunpack.c.l.b16 %v158
    %v422 = vunpack.c.l.b16 %v159
    %v423 = vunpack.c.l.b16 %v160
    %v424 = vunpack.c.l.b16 %v161
    %v425 = vunpack.c.l.b16 %v162
    %v426 = vunpack.c.l.b16 %v163
    %v427 = vunpack.c.l.b16 %v164
    %v428 = vunpack.c.l.b16 %v165
    %v429 = vunpack.c.l.b16 %v166
    %v430 = vunpack.c.l.b16 %v167
    %v431 = vunpack.c.l.b16 %v168
    %v432 = vunpack.c.l.b16 %v169
    %v433 = vunpack.c.l.b16 %v170
    %v434 = vunpack.c.l.b16 %v171
    %v435 = vunpack.c.l.b16 %v172
    %v436 = vunpack.c.l.b16 %v173
    %v437 = vunpack.c.l.b16 %v174
    %v438 = vunpack.c.l.b16 %v175
    %v439 = vunpack.c.l.b16 %v176
    %v440 = vunpack.c.l.b16 %v177
    %v441 = vunpack.c.l.b16 %v178
    %v442 = vunpack.c.l.b16 %v179
    %v443 = vunpack.c.l.b16 %v180
    %v444 = vunpack.c.l.b16 %v181
    %v445 = vunpack.c.l.b16 %v182
    %v446 = vunpack.c.l.b16 %v183
    %v447 = vunpack.c.l.b16 %v184
    %v448 = vunpack.c.l.b16 %v185
    %v449 = vunpack.c.l.b16 %v186
    %v450 = vunpack.c.l.b16 %v187
    %v451 = vunpack.c.l.b16 %v188
    %v452 = vunpack.c.l.b16 %v189
    %v453 = vunpack.c.l.b16 %v190
    %v454 = vunpack.c.l.b16 %v191
    %v455 = vunpack.c.l.b16 %v192
    %v456 = vunpack.c.l.b16 %v193
    %v457 = vunpack.c.l.b16 %v194
    %v458 = vunpack.c.l.b16 %v195
    %v459 = vunpack.c.l.b16 %v196
    %v460 = vunpack.c.l.b16 %v197
    %v461 = vunpack.c.l.b16 %v198
    %v462 = vpack.c.b16 %v335, %v334
    %v463 = vpack.c.b16 %v337, %v336
    %v464 = vpack.c.b16 %v339, %v338
    %v465 = vpack.c.b16 %v341, %v340
    %v466 = vpack.c.b16 %v343, %v342
    %v467 = vpack.c.b16 %v345, %v344
    %v468 = vpack.c.b16 %v347, %v346
    %v469 = vpack.c.b16 %v349, %v348
    %v470 = vpack.c.b16 %v351, %v350
    %v471 = vpack.c.b16 %v353, %v352
    %v472 = vpack.c.b16 %v355, %v354
    %v473 = vpack.c.b16 %v357, %v356
    %v474 = vpack.c.b16 %v359, %v358
    %v475 = vpack.c.b16 %v361, %v360
    %v476 = vpack.c.b16 %v363, %v362
    %v477 = vpack.c.b16 %v365, %v364
    %v478 = vpack.c.b16 %v367, %v366
    %v479 = vpack.c.b16 %v369, %v368
    %v480 = vpack.c.b16 %v371, %v370
    %v481 = vpack.c.b16 %v373, %v372
    %v482 = vpack.c.b16 %v375, %v374
    %v483 = vpack.c.b16 %v377, %v376
    %v484 = vpack.c.b16 %v379, %v378
    %v485 = vpack.c.b16 %v381, %v380
    %v486 = vpack.c.b16 %v383, %v382
    %v487 = vpack.c.b16 %v385, %v384
    %v488 = vpack.c.b16 %v387, %v386
    %v489 = vpack.c.b16 %v389, %v388
    %v490 = vpack.c.b16 %v391, %v390
    %v491 = vpack.c.b16 %v393, %v392
    %v492 = vpack.c.b16 %v395, %v394
    %v493 = vpack.c.b16 %v397, %v396
    %v494 = vpack.c.b16 %v399, %v398
    %v495 = vpack.c.b16 %v401, %v400
    %v496 = vpack.c.b16 %v403, %v402
    %v497 = vpack.c.b16 %v405, %v404
    %v498 = vpack.c.b16 %v407, %v406
    %v499 = vpack.c.b16 %v409, %v408
    %v500 = vpack.c.b16 %v411, %v410
    %v501 = vpack.c.b16 %v413, %v412
    %v502 = vpack.c.b16 %v415, %v414
    %v503 = vpack.c.b16 %v417, %v416
    %v504 = vpack.c.b16 %v419, %v418
    %v505 = vpack.c.b16 %v421, %v420
    %v506 = vpack.c.b16 %v423, %v422
    %v507 = vpack.c.b16 %v425, %v424
    %v508 = vpack.c.b16 %v427, %v426
    %v509 = vpack.c.b16 %v429, %v428
    %v510 = vpack.c.b16 %v431, %v430
    %v511 = vpack.c.b16 %v433, %v432
    %v512 = vpack.c.b16 %v435, %v434
    %v513 = vpack.c.b16 %v437, %v436
    %v514 = vpack.c.b16 %v439, %v438
    %v515 = vpack.c.b16 %v441, %v440
    %v516 = vpack.c.b16 %v443, %v442
    %v517 = vpack.c.b16 %v445, %v444
    %v518 = vpack.c.b16 %v447, %v446
    %v519 = vpack.c.b16 %v449, %v448
    %v520 = vpack.c.b16 %v451, %v450
    %v521 = vpack.c.b16 %v453, %v452
    %v522 = vpack.c.b16 %v455, %v454
    %v523 = vpack.c.b16 %v457, %v456
    %v524 = vpack.c.b16 %v459, %v458
    %v525 = vpack.c.b16 %v461, %v460
    %590 = vmatprep.subr.bf16.mxu0 0
    %591 = vmatpush1.bf16.msra.mxu0 %v462
    %592 = vmatprep.subr.bf16.mxu0 0
    %593 = vmatpush1.bf16.msra.mxu0 %v463
    %594 = vmatprep.subr.bf16.mxu0 0
    %595 = vmatpush1.bf16.msra.mxu0 %v464
    %596 = vmatprep.subr.bf16.mxu0 0
    %597 = vmatpush1.bf16.msra.mxu0 %v465
    %598 = vmatprep.subr.bf16.mxu0 0
    %599 = vmatpush1.bf16.msra.mxu0 %v466
    %600 = vmatprep.subr.bf16.mxu0 0
    %601 = vmatpush1.bf16.msra.mxu0 %v467
    %602 = vmatprep.subr.bf16.mxu0 0
    %603 = vmatpush1.bf16.msra.mxu0 %v468
    %604 = vmatprep.subr.bf16.mxu0 0
    %605 = vmatpush1.bf16.msra.mxu0 %v469
    %606 = vmatprep.subr.bf16.mxu0 0
    %607 = vmatpush1.bf16.msra.mxu0 %v470
    %608 = vmatprep.subr.bf16.mxu0 0
    %609 = vmatpush1.bf16.msra.mxu0 %v471
    %610 = vmatprep.subr.bf16.mxu0 0
    %611 = vmatpush1.bf16.msra.mxu0 %v472
    %612 = vmatprep.subr.bf16.mxu0 0
    %613 = vmatpush1.bf16.msra.mxu0 %v473
    %614 = vmatprep.subr.bf16.mxu0 0
    %615 = vmatpush1.bf16.msra.mxu0 %v474
    %616 = vmatprep.subr.bf16.mxu0 0
    %617 = vmatpush1.bf16.msra.mxu0 %v475
    %618 = vmatprep.subr.bf16.mxu0 0
    %619 = vmatpush1.bf16.msra.mxu0 %v476
    %620 = vmatprep.subr.bf16.mxu0 0
    %621 = vmatpush1.bf16.msra.mxu0 %v477
    %622 = vmatprep.mubr.bf16.mxu0 %v64
    %623 = vmatmul.mubr.bf16.gmra.mrb[0].mxu0 %v63
    %v624 = vpop.f32.mrb[0].mxu0
    %v625 = vadd.f32 %v204, %v624
    %v626 = vpop.f32.mrb[0].mxu0
    %v627 = vpop.f32.mrb[0].mxu0
    %v628 = vpop.f32.mrb[0].mxu0
    %629 = vdwg.mxu0
    %630 = vmatprep.subr.bf16.mxu0 0
    %631 = vmatpush1.bf16.msra.mxu0 %v478
    %632 = vmatprep.subr.bf16.mxu0 0
    %633 = vmatpush1.bf16.msra.mxu0 %v479
    %634 = vmatprep.subr.bf16.mxu0 0
    %635 = vmatpush1.bf16.msra.mxu0 %v480
    %636 = vmatprep.subr.bf16.mxu0 0
    %637 = vmatpush1.bf16.msra.mxu0 %v481
    %638 = vmatprep.subr.bf16.mxu0 0
    %639 = vmatpush1.bf16.msra.mxu0 %v482
    %640 = vmatprep.subr.bf16.mxu0 0
    %641 = vmatpush1.bf16.msra.mxu0 %v483
    %642 = vmatprep.subr.bf16.mxu0 0
    %643 = vmatpush1.bf16.msra.mxu0 %v484
    %644 = vmatprep.subr.bf16.mxu0 0
    %645 = vmatpush1.bf16.msra.mxu0 %v485
    %646 = vmatprep.subr.bf16.mxu0 0
    %647 = vmatpush1.bf16.msra.mxu0 %v486
    %648 = vmatprep.subr.bf16.mxu0 0
    %649 = vmatpush1.bf16.msra.mxu0 %v487
    %650 = vmatprep.subr.bf16.mxu0 0
    %651 = vmatpush1.bf16.msra.mxu0 %v488
    %652 = vmatprep.subr.bf16.mxu0 0
    %653 = vmatpush1.bf16.msra.mxu0 %v489
    %654 = vmatprep.subr.bf16.mxu0 0
    %655 = vmatpush1.bf16.msra.mxu0 %v490
    %656 = vmatprep.subr.bf16.mxu0 0
    %657 = vmatpush1.bf16.msra.mxu0 %v491
    %658 = vmatprep.subr.bf16.mxu0 0
    %659 = vmatpush1.bf16.msra.mxu0 %v492
    %660 = vmatprep.subr.bf16.mxu0 0
    %661 = vmatpush1.bf16.msra.mxu0 %v493
    %662 = vmatprep.mubr.bf16.mxu0 %v66
    %663 = vmatmul.mubr.bf16.gmra.mrb[0].mxu0 %v65
    %v664 = vpop.f32.mrb[0].mxu0
    %v665 = vadd.f32 %v625, %v664
    %v666 = vpop.f32.mrb[0].mxu0
    %v667 = vpop.f32.mrb[0].mxu0
    %v668 = vpop.f32.mrb[0].mxu0
    %669 = vdwg.mxu0
    %670 = vmatprep.subr.bf16.mxu0 0
    %671 = vmatpush1.bf16.msra.mxu0 %v494
    %672 = vmatprep.subr.bf16.mxu0 0
    %673 = vmatpush1.bf16.msra.mxu0 %v495
    %674 = vmatprep.subr.bf16.mxu0 0
    %675 = vmatpush1.bf16.msra.mxu0 %v496
    %676 = vmatprep.subr.bf16.mxu0 0
    %677 = vmatpush1.bf16.msra.mxu0 %v497
    %678 = vmatprep.subr.bf16.mxu0 0
    %679 = vmatpush1.bf16.msra.mxu0 %v498
    %680 = vmatprep.subr.bf16.mxu0 0
    %681 = vmatpush1.bf16.msra.mxu0 %v499
    %682 = vmatprep.subr.bf16.mxu0 0
    %683 = vmatpush1.bf16.msra.mxu0 %v500
    %684 = vmatprep.subr.bf16.mxu0 0
    %685 = vmatpush1.bf16.msra.mxu0 %v501
    %686 = vmatprep.subr.bf16.mxu0 0
    %687 = vmatpush1.bf16.msra.mxu0 %v502
    %688 = vmatprep.subr.bf16.mxu0 0
    %689 = vmatpush1.bf16.msra.mxu0 %v503
    %690 = vmatprep.subr.bf16.mxu0 0
    %691 = vmatpush1.bf16.msra.mxu0 %v504
    %692 = vmatprep.subr.bf16.mxu0 0
    %693 = vmatpush1.bf16.msra.mxu0 %v505
    %694 = vmatprep.subr.bf16.mxu0 0
    %695 = vmatpush1.bf16.msra.mxu0 %v506
    %696 = vmatprep.subr.bf16.mxu0 0
    %697 = vmatpush1.bf16.msra.mxu0 %v507
    %698 = vmatprep.subr.bf16.mxu0 0
    %699 = vmatpush1.bf16.msra.mxu0 %v508
    %700 = vmatprep.subr.bf16.mxu0 0
    %701 = vmatpush1.bf16.msra.mxu0 %v509
    %702 = vmatprep.mubr.bf16.mxu0 %v68
    %703 = vmatmul.mubr.bf16.gmra.mrb[0].mxu0 %v67
    %v704 = vpop.f32.mrb[0].mxu0
    %v705 = vadd.f32 %v665, %v704
    %v706 = vpop.f32.mrb[0].mxu0
    %v707 = vpop.f32.mrb[0].mxu0
    %v708 = vpop.f32.mrb[0].mxu0
    %709 = vdwg.mxu0
    %710 = vmatprep.subr.bf16.mxu0 0
    %711 = vmatpush1.bf16.msra.mxu0 %v510
    %712 = vmatprep.subr.bf16.mxu0 0
    %713 = vmatpush1.bf16.msra.mxu0 %v511
    %714 = vmatprep.subr.bf16.mxu0 0
    %715 = vmatpush1.bf16.msra.mxu0 %v512
    %716 = vmatprep.subr.bf16.mxu0 0
    %717 = vmatpush1.bf16.msra.mxu0 %v513
    %718 = vmatprep.subr.bf16.mxu0 0
    %719 = vmatpush1.bf16.msra.mxu0 %v514
    %720 = vmatprep.subr.bf16.mxu0 0
    %721 = vmatpush1.bf16.msra.mxu0 %v515
    %722 = vmatprep.subr.bf16.mxu0 0
    %723 = vmatpush1.bf16.msra.mxu0 %v516
    %724 = vmatprep.subr.bf16.mxu0 0
    %725 = vmatpush1.bf16.msra.mxu0 %v517
    %726 = vmatprep.subr.bf16.mxu0 0
    %727 = vmatpush1.bf16.msra.mxu0 %v518
    %728 = vmatprep.subr.bf16.mxu0 0
    %729 = vmatpush1.bf16.msra.mxu0 %v519
    %730 = vmatprep.subr.bf16.mxu0 0
    %731 = vmatpush1.bf16.msra.mxu0 %v520
    %732 = vmatprep.subr.bf16.mxu0 0
    %733 = vmatpush1.bf16.msra.mxu0 %v521
    %734 = vmatprep.subr.bf16.mxu0 0
    %735 = vmatpush1.bf16.msra.mxu0 %v522
    %736 = vmatprep.subr.bf16.mxu0 0
    %737 = vmatpush1.bf16.msra.mxu0 %v523
    %738 = vmatprep.subr.bf16.mxu0 0
    %739 = vmatpush1.bf16.msra.mxu0 %v524
    %740 = vmatprep.subr.bf16.mxu0 0
    %741 = vmatpush1.bf16.msra.mxu0 %v525
    %742 = vmatprep.mubr.bf16.mxu0 %v70
    %743 = vmatmul.mubr.bf16.gmra.mrb[0].mxu0 %v69
    %v744 = vpop.f32.mrb[0].mxu0
    %v745 = vadd.f32 %v705, %v744
    %v746 = vpop.f32.mrb[0].mxu0
    %v747 = vpop.f32.mrb[0].mxu0
    %v748 = vpop.f32.mrb[0].mxu0
    %749 = vdwg.mxu0
    %v750 = vld [vmem:[%s1] sm:$0xff]
    %v751 = vld [vmem:[%s2] sm:$0xff]
    %v752 = vlaneseq
    %v753 = vand.u32 %v752, 127
    %754 = vset.pattern.permute.xlu0 0
    %755 = vperm.xlu0 %754, %v750
    %v756 = vpop.permute.xlu0 %755
    %vm757 = vcmp.eq.s32.totalorder %v756, %v753
    %v758 = vsel %vm757, 0.125, 0.0
    %v759 = vadd.f32 %v758, 0.0
    %760 = vset.pattern.permute.xlu0 1
    %761 = vperm.xlu0 %760, %v750
    %v762 = vpop.permute.xlu0 %761
    %vm763 = vcmp.eq.s32.totalorder %v762, %v753
    %v764 = vsel %vm763, 0.125, 0.0
    %v765 = vadd.f32 %v759, %v764
    %766 = vset.pattern.permute.xlu0 2
    %767 = vperm.xlu0 %766, %v750
    %v768 = vpop.permute.xlu0 %767
    %vm769 = vcmp.eq.s32.totalorder %v768, %v753
    %v770 = vsel %vm769, 0.125, 0.0
    %v771 = vadd.f32 %v765, %v770
    %772 = vset.pattern.permute.xlu0 3
    %773 = vperm.xlu0 %772, %v750
    %v774 = vpop.permute.xlu0 %773
    %vm775 = vcmp.eq.s32.totalorder %v774, %v753
    %v776 = vsel %vm775, 0.125, 0.0
    %v777 = vadd.f32 %v771, %v776
    %778 = vset.pattern.permute.xlu0 4
    %779 = vperm.xlu0 %778, %v750
    %v780 = vpop.permute.xlu0 %779
    %vm781 = vcmp.eq.s32.totalorder %v780, %v753
    %v782 = vsel %vm781, 0.125, 0.0
    %v783 = vadd.f32 %v777, %v782
    %784 = vset.pattern.permute.xlu0 5
    %785 = vperm.xlu0 %784, %v750
    %v786 = vpop.permute.xlu0 %785
    %vm787 = vcmp.eq.s32.totalorder %v786, %v753
    %v788 = vsel %vm787, 0.125, 0.0
    %v789 = vadd.f32 %v783, %v788
    %790 = vset.pattern.permute.xlu0 6
    %791 = vperm.xlu0 %790, %v750
    %v792 = vpop.permute.xlu0 %791
    %vm793 = vcmp.eq.s32.totalorder %v792, %v753
    %v794 = vsel %vm793, 0.125, 0.0
    %v795 = vadd.f32 %v789, %v794
    %796 = vset.pattern.permute.xlu0 7
    %797 = vperm.xlu0 %796, %v750
    %v798 = vpop.permute.xlu0 %797
    %vm799 = vcmp.eq.s32.totalorder %v798, %v753
    %v800 = vsel %vm799, 0.125, 0.0
    %v801 = vadd.f32 %v795, %v800
    %v802 = vadd.s32 %v751, 16
    %803 = vset.pattern.permute.xlu0 0
    %804 = vperm.xlu0 %803, %v802
    %v805 = vpop.permute.xlu0 %804
    %vm806 = vcmp.eq.s32.totalorder %v805, %v753
    %v807 = vsel %vm806, 1.0, 0.0
    %v808 = vadd.f32 %v801, %v807
    %v809 = vpack.c.bf16 %v808, %v808
    %v810 = vld [vmem:[%s5] sm:$0xf]
    %v811 = vld [vmem:[%s5 + $0x4] sm:$0xf]
    %v812 = vld [vmem:[%s5 + $0x8] sm:$0x7]
    %v816 = vunpack.c.l.b16 %v810
    %v817 = vunpack.c.l.b16 %v811
    %v818 = vunpack.c.l.b16 %v812
    %v819 = vpack.c.b16 %v817, %v816
    %v820 = vpack.c.b16 %v818, %v818
    %vm822 = vcmask 179200
    %v824 = vsel %vm822, %v809, 0
    %vm826 = vcmask 1042432
    %v828 = vsel %vm826, %v820, 0
    %830 = vmatprep.subr.bf16.mxu0 0
    %831 = vmatpush1.bf16.msra.mxu0 %v819
    %832 = vmatprep.subr.bf16.mxu0 0
    %833 = vmatpush1.bf16.msra.mxu0 %v828
    %834 = vmatprep.subr.bf16.mxu0 0
    %835 = vmatpush1.bf16.msra.mxu0 0
    %836 = vmatprep.subr.bf16.mxu0 0
    %837 = vmatpush1.bf16.msra.mxu0 0
    %838 = vmatprep.subr.bf16.mxu0 0
    %839 = vmatpush1.bf16.msra.mxu0 0
    %840 = vmatprep.subr.bf16.mxu0 0
    %841 = vmatpush1.bf16.msra.mxu0 0
    %842 = vmatprep.subr.bf16.mxu0 0
    %843 = vmatpush1.bf16.msra.mxu0 0
    %844 = vmatprep.subr.bf16.mxu0 0
    %845 = vmatpush1.bf16.msra.mxu0 0
    %846 = vmatprep.subr.bf16.mxu0 0
    %847 = vmatpush1.bf16.msra.mxu0 0
    %848 = vmatprep.subr.bf16.mxu0 0
    %849 = vmatpush1.bf16.msra.mxu0 0
    %850 = vmatprep.subr.bf16.mxu0 0
    %851 = vmatpush1.bf16.msra.mxu0 0
    %852 = vmatprep.subr.bf16.mxu0 0
    %853 = vmatpush1.bf16.msra.mxu0 0
    %854 = vmatprep.subr.bf16.mxu0 0
    %855 = vmatpush1.bf16.msra.mxu0 0
    %856 = vmatprep.subr.bf16.mxu0 0
    %857 = vmatpush1.bf16.msra.mxu0 0
    %858 = vmatprep.subr.bf16.mxu0 0
    %859 = vmatpush1.bf16.msra.mxu0 0
    %860 = vmatprep.subr.bf16.mxu0 0
    %861 = vmatpush1.bf16.msra.mxu0 0
    %862 = vmatprep.mubr.bf16.mxu0 0
    %863 = vmatmul.mubr.bf16.gmra.mrb[0].mxu0 %v824
    %v864 = vpop.f32.mrb[0].mxu0
    %v865 = vadd.f32 0.0, %v864
    %v866 = vpop.f32.mrb[0].mxu0
    %v867 = vpop.f32.mrb[0].mxu0
    %v868 = vpop.f32.mrb[0].mxu0
    %869 = vdwg.mxu0
    %v870 = vpack.c.bf16 %v745, %v745
    %v871 = vld [vmem:[%s6] sm:$0xff]
    %v872 = vld [vmem:[%s6 + $0x8] sm:$0xff]
    %v873 = vld [vmem:[%s6 + $0x10] sm:$0xff]
    %v874 = vld [vmem:[%s6 + $0x18] sm:$0xff]
    %v875 = vld [vmem:[%s6 + $0x20] sm:$0xff]
    %v876 = vld [vmem:[%s6 + $0x28] sm:$0xff]
    %v877 = vld [vmem:[%s6 + $0x30] sm:$0xff]
    %v878 = vld [vmem:[%s6 + $0x38] sm:$0xff]
    %v879 = vpack.c.bf16 %v865, %v865
    %v880 = vld [vmem:[%s7] sm:$0xff]
    %v881 = vld [vmem:[%s7 + $0x8] sm:$0xff]
    %v882 = vld [vmem:[%s7 + $0x10] sm:$0xff]
    %v883 = vld [vmem:[%s7 + $0x18] sm:$0xff]
    %v884 = vld [vmem:[%s7 + $0x20] sm:$0xff]
    %v885 = vld [vmem:[%s7 + $0x28] sm:$0xff]
    %v886 = vld [vmem:[%s7 + $0x30] sm:$0xff]
    %v887 = vld [vmem:[%s7 + $0x38] sm:$0xff]
    %v888 = vld [vmem:[%s7 + $0x40] sm:$0xff]
    %v889 = vld [vmem:[%s7 + $0x48] sm:$0xff]
    %v890 = vld [vmem:[%s7 + $0x50] sm:$0xff]
    %v891 = vld [vmem:[%s7 + $0x58] sm:$0xff]
    %v904 = vunpack.c.l.b16 %v880
    %v905 = vunpack.c.h.b16 %v880
    %v906 = vunpack.c.l.b16 %v881
    %v907 = vunpack.c.h.b16 %v881
    %v908 = vunpack.c.l.b16 %v882
    %v909 = vunpack.c.h.b16 %v882
    %v910 = vunpack.c.l.b16 %v883
    %v911 = vunpack.c.h.b16 %v883
    %v912 = vunpack.c.l.b16 %v884
    %v913 = vunpack.c.h.b16 %v884
    %v914 = vunpack.c.l.b16 %v885
    %v915 = vunpack.c.h.b16 %v885
    %v916 = vunpack.c.l.b16 %v886
    %v917 = vunpack.c.h.b16 %v886
    %v918 = vunpack.c.l.b16 %v887
    %v919 = vunpack.c.h.b16 %v887
    %v920 = vunpack.c.l.b16 %v888
    %v921 = vunpack.c.h.b16 %v888
    %v922 = vunpack.c.l.b16 %v889
    %v923 = vunpack.c.h.b16 %v889
    %v924 = vunpack.c.l.b16 %v890
    %v925 = vunpack.c.h.b16 %v890
    %v926 = vunpack.c.l.b16 %v891
    %v927 = vunpack.c.h.b16 %v891
    %v928 = vpack.c.b16 %v908, %v904
    %v929 = vpack.c.b16 %v909, %v905
    %v930 = vpack.c.b16 %v910, %v906
    %v931 = vpack.c.b16 %v911, %v907
    %v932 = vpack.c.b16 %v916, %v912
    %v933 = vpack.c.b16 %v917, %v913
    %v934 = vpack.c.b16 %v918, %v914
    %v935 = vpack.c.b16 %v919, %v915
    %v936 = vpack.c.b16 %v924, %v920
    %v937 = vpack.c.b16 %v925, %v921
    %v938 = vpack.c.b16 %v926, %v922
    %v939 = vpack.c.b16 %v927, %v923
    %vm952 = vcmask 392192
    %v954 = vsel %vm952, %v879, 0
    %956 = vmatprep.subr.bf16.mxu0 %v929
    %957 = vmatpush1.bf16.msra.mxu0 %v928
    %958 = vmatprep.subr.bf16.mxu0 %v933
    %959 = vmatpush1.bf16.msra.mxu0 %v932
    %960 = vmatprep.subr.bf16.mxu0 %v937
    %961 = vmatpush1.bf16.msra.mxu0 %v936
    %962 = vmatprep.subr.bf16.mxu0 0
    %963 = vmatpush1.bf16.msra.mxu0 0
    %964 = vmatprep.subr.bf16.mxu0 0
    %965 = vmatpush1.bf16.msra.mxu0 0
    %966 = vmatprep.subr.bf16.mxu0 0
    %967 = vmatpush1.bf16.msra.mxu0 0
    %968 = vmatprep.subr.bf16.mxu0 0
    %969 = vmatpush1.bf16.msra.mxu0 0
    %970 = vmatprep.subr.bf16.mxu0 0
    %971 = vmatpush1.bf16.msra.mxu0 0
    %972 = vmatprep.subr.bf16.mxu0 0
    %973 = vmatpush1.bf16.msra.mxu0 0
    %974 = vmatprep.subr.bf16.mxu0 0
    %975 = vmatpush1.bf16.msra.mxu0 0
    %976 = vmatprep.subr.bf16.mxu0 0
    %977 = vmatpush1.bf16.msra.mxu0 0
    %978 = vmatprep.subr.bf16.mxu0 0
    %979 = vmatpush1.bf16.msra.mxu0 0
    %980 = vmatprep.subr.bf16.mxu0 0
    %981 = vmatpush1.bf16.msra.mxu0 0
    %982 = vmatprep.subr.bf16.mxu0 0
    %983 = vmatpush1.bf16.msra.mxu0 0
    %984 = vmatprep.subr.bf16.mxu0 0
    %985 = vmatpush1.bf16.msra.mxu0 0
    %986 = vmatprep.subr.bf16.mxu0 0
    %987 = vmatpush1.bf16.msra.mxu0 0
    %988 = vmatprep.mubr.bf16.mxu0 0
    %989 = vmatmul.mubr.bf16.gmra.mrb[0].mxu0 %v954
    %v990 = vpop.f32.mrb[0].mxu0
    %v991 = vadd.f32 0.0, %v990
    %v992 = vpop.f32.mrb[0].mxu0
    %v993 = vadd.f32 0.0, %v992
    %v994 = vpop.f32.mrb[0].mxu0
    %v995 = vpop.f32.mrb[0].mxu0
    %996 = vdwg.mxu0
    %997 = vmatprep.subr.bf16.mxu0 %v931
    %998 = vmatpush1.bf16.msra.mxu0 %v930
    %999 = vmatprep.subr.bf16.mxu0 %v935
    %1000 = vmatpush1.bf16.msra.mxu0 %v934
    %1001 = vmatprep.subr.bf16.mxu0 %v939
    %1002 = vmatpush1.bf16.msra.mxu0 %v938
    %1003 = vmatprep.subr.bf16.mxu0 0
    %1004 = vmatpush1.bf16.msra.mxu0 0
    %1005 = vmatprep.subr.bf16.mxu0 0
    %1006 = vmatpush1.bf16.msra.mxu0 0
    %1007 = vmatprep.subr.bf16.mxu0 0
    %1008 = vmatpush1.bf16.msra.mxu0 0
    %1009 = vmatprep.subr.bf16.mxu0 0
    %1010 = vmatpush1.bf16.msra.mxu0 0
    %1011 = vmatprep.subr.bf16.mxu0 0
    %1012 = vmatpush1.bf16.msra.mxu0 0
    %1013 = vmatprep.subr.bf16.mxu0 0
    %1014 = vmatpush1.bf16.msra.mxu0 0
    %1015 = vmatprep.subr.bf16.mxu0 0
    %1016 = vmatpush1.bf16.msra.mxu0 0
    %1017 = vmatprep.subr.bf16.mxu0 0
    %1018 = vmatpush1.bf16.msra.mxu0 0
    %1019 = vmatprep.subr.bf16.mxu0 0
    %1020 = vmatpush1.bf16.msra.mxu0 0
    %1021 = vmatprep.subr.bf16.mxu0 0
    %1022 = vmatpush1.bf16.msra.mxu0 0
    %1023 = vmatprep.subr.bf16.mxu0 0
    %1024 = vmatpush1.bf16.msra.mxu0 0
    %1025 = vmatprep.subr.bf16.mxu0 0
    %1026 = vmatpush1.bf16.msra.mxu0 0
    %1027 = vmatprep.subr.bf16.mxu0 0
    %1028 = vmatpush1.bf16.msra.mxu0 0
    %1029 = vmatprep.mubr.bf16.mxu0 0
    %1030 = vmatmul.mubr.bf16.gmra.mrb[0].mxu0 %v954
    %v1031 = vpop.f32.mrb[0].mxu0
    %v1032 = vadd.f32 0.0, %v1031
    %v1033 = vpop.f32.mrb[0].mxu0
    %v1034 = vadd.f32 0.0, %v1033
    %v1035 = vpop.f32.mrb[0].mxu0
    %v1036 = vpop.f32.mrb[0].mxu0
    %1037 = vdwg.mxu0
    %v1046 = vunpack.c.l.b16 %v871
    %v1047 = vunpack.c.h.b16 %v871
    %v1048 = vunpack.c.l.b16 %v872
    %v1049 = vunpack.c.h.b16 %v872
    %v1050 = vunpack.c.l.b16 %v873
    %v1051 = vunpack.c.h.b16 %v873
    %v1052 = vunpack.c.l.b16 %v874
    %v1053 = vunpack.c.h.b16 %v874
    %v1054 = vunpack.c.l.b16 %v875
    %v1055 = vunpack.c.h.b16 %v875
    %v1056 = vunpack.c.l.b16 %v876
    %v1057 = vunpack.c.h.b16 %v876
    %v1058 = vunpack.c.l.b16 %v877
    %v1059 = vunpack.c.h.b16 %v877
    %v1060 = vunpack.c.l.b16 %v878
    %v1061 = vunpack.c.h.b16 %v878
    %v1062 = vpack.c.b16 %v1050, %v1046
    %v1063 = vpack.c.b16 %v1051, %v1047
    %v1064 = vpack.c.b16 %v1052, %v1048
    %v1065 = vpack.c.b16 %v1053, %v1049
    %v1066 = vpack.c.b16 %v1058, %v1054
    %v1067 = vpack.c.b16 %v1059, %v1055
    %v1068 = vpack.c.b16 %v1060, %v1056
    %v1069 = vpack.c.b16 %v1061, %v1057
    %vm1078 = vcmask 261120
    %v1080 = vsel %vm1078, %v870, 0
    %1082 = vmatprep.subr.bf16.mxu0 %v1063
    %1083 = vmatpush1.bf16.msra.mxu0 %v1062
    %1084 = vmatprep.subr.bf16.mxu0 %v1067
    %1085 = vmatpush1.bf16.msra.mxu0 %v1066
    %1086 = vmatprep.subr.bf16.mxu0 0
    %1087 = vmatpush1.bf16.msra.mxu0 0
    %1088 = vmatprep.subr.bf16.mxu0 0
    %1089 = vmatpush1.bf16.msra.mxu0 0
    %1090 = vmatprep.subr.bf16.mxu0 0
    %1091 = vmatpush1.bf16.msra.mxu0 0
    %1092 = vmatprep.subr.bf16.mxu0 0
    %1093 = vmatpush1.bf16.msra.mxu0 0
    %1094 = vmatprep.subr.bf16.mxu0 0
    %1095 = vmatpush1.bf16.msra.mxu0 0
    %1096 = vmatprep.subr.bf16.mxu0 0
    %1097 = vmatpush1.bf16.msra.mxu0 0
    %1098 = vmatprep.subr.bf16.mxu0 0
    %1099 = vmatpush1.bf16.msra.mxu0 0
    %1100 = vmatprep.subr.bf16.mxu0 0
    %1101 = vmatpush1.bf16.msra.mxu0 0
    %1102 = vmatprep.subr.bf16.mxu0 0
    %1103 = vmatpush1.bf16.msra.mxu0 0
    %1104 = vmatprep.subr.bf16.mxu0 0
    %1105 = vmatpush1.bf16.msra.mxu0 0
    %1106 = vmatprep.subr.bf16.mxu0 0
    %1107 = vmatpush1.bf16.msra.mxu0 0
    %1108 = vmatprep.subr.bf16.mxu0 0
    %1109 = vmatpush1.bf16.msra.mxu0 0
    %1110 = vmatprep.subr.bf16.mxu0 0
    %1111 = vmatpush1.bf16.msra.mxu0 0
    %1112 = vmatprep.subr.bf16.mxu0 0
    %1113 = vmatpush1.bf16.msra.mxu0 0
    %1114 = vmatprep.mubr.bf16.mxu0 0
    %1115 = vmatmul.mubr.bf16.gmra.mrb[0].mxu0 %v1080
    %v1116 = vpop.f32.mrb[0].mxu0
    %v1117 = vadd.f32 %v991, %v1116
    %v1118 = vpop.f32.mrb[0].mxu0
    %v1119 = vadd.f32 %v993, %v1118
    %v1120 = vpop.f32.mrb[0].mxu0
    %v1121 = vpop.f32.mrb[0].mxu0
    %1122 = vdwg.mxu0
    %1123 = vmatprep.subr.bf16.mxu0 %v1065
    %1124 = vmatpush1.bf16.msra.mxu0 %v1064
    %1125 = vmatprep.subr.bf16.mxu0 %v1069
    %1126 = vmatpush1.bf16.msra.mxu0 %v1068
    %1127 = vmatprep.subr.bf16.mxu0 0
    %1128 = vmatpush1.bf16.msra.mxu0 0
    %1129 = vmatprep.subr.bf16.mxu0 0
    %1130 = vmatpush1.bf16.msra.mxu0 0
    %1131 = vmatprep.subr.bf16.mxu0 0
    %1132 = vmatpush1.bf16.msra.mxu0 0
    %1133 = vmatprep.subr.bf16.mxu0 0
    %1134 = vmatpush1.bf16.msra.mxu0 0
    %1135 = vmatprep.subr.bf16.mxu0 0
    %1136 = vmatpush1.bf16.msra.mxu0 0
    %1137 = vmatprep.subr.bf16.mxu0 0
    %1138 = vmatpush1.bf16.msra.mxu0 0
    %1139 = vmatprep.subr.bf16.mxu0 0
    %1140 = vmatpush1.bf16.msra.mxu0 0
    %1141 = vmatprep.subr.bf16.mxu0 0
    %1142 = vmatpush1.bf16.msra.mxu0 0
    %1143 = vmatprep.subr.bf16.mxu0 0
    %1144 = vmatpush1.bf16.msra.mxu0 0
    %1145 = vmatprep.subr.bf16.mxu0 0
    %1146 = vmatpush1.bf16.msra.mxu0 0
    %1147 = vmatprep.subr.bf16.mxu0 0
    %1148 = vmatpush1.bf16.msra.mxu0 0
    %1149 = vmatprep.subr.bf16.mxu0 0
    %1150 = vmatpush1.bf16.msra.mxu0 0
    %1151 = vmatprep.subr.bf16.mxu0 0
    %1152 = vmatpush1.bf16.msra.mxu0 0
    %1153 = vmatprep.subr.bf16.mxu0 0
    %1154 = vmatpush1.bf16.msra.mxu0 0
    %1155 = vmatprep.mubr.bf16.mxu0 0
    %1156 = vmatmul.mubr.bf16.gmra.mrb[0].mxu0 %v1080
    %v1157 = vpop.f32.mrb[0].mxu0
    %v1158 = vadd.f32 %v1032, %v1157
    %v1159 = vpop.f32.mrb[0].mxu0
    %v1160 = vadd.f32 %v1034, %v1159
    %v1161 = vpop.f32.mrb[0].mxu0
    %v1162 = vpop.f32.mrb[0].mxu0
    %1163 = vdwg.mxu0
    %v1164 = vld [vmem:[%s8] sm:$0xf]
    %v1166 = vlaneseq
    %v1167 = vshrl.u32 %v1166, 7
    %v1168 = vsub.s32 0, %v1167
    %v1169 = vrot.slane %v1164, %v1168
    %v1170 = vlaneseq
    %v1171 = vshrl.u32 %v1170, 7
    %v1172 = vsub.s32 1, %v1171
    %v1173 = vrot.slane %v1164, %v1172
    %v1174 = vlaneseq
    %v1175 = vshrl.u32 %v1174, 7
    %v1176 = vsub.s32 2, %v1175
    %v1177 = vrot.slane %v1164, %v1176
    %v1178 = vlaneseq
    %v1179 = vshrl.u32 %v1178, 7
    %v1180 = vsub.s32 3, %v1179
    %v1181 = vrot.slane %v1164, %v1180
    %v1186 = vadd.f32 %v1117, %v1169
    %v1187 = vadd.f32 %v1119, %v1173
    %v1188 = vadd.f32 %v1158, %v1177
    %v1189 = vadd.f32 %v1160, %v1181
    %v1190 = vmax.f32 %v1186, 0.0
    %v1191 = vmax.f32 %v1187, 0.0
    %v1192 = vmax.f32 %v1188, 0.0
    %v1193 = vmax.f32 %v1189, 0.0
    %v1194 = vpack.c.bf16 %v1190, %v1190
    %v1195 = vpack.c.bf16 %v1191, %v1191
    %v1196 = vpack.c.bf16 %v1192, %v1192
    %v1197 = vpack.c.bf16 %v1193, %v1193
    %v1198 = vld [vmem:[#allocation2] sm:$0xf]
    %v1199 = vld [vmem:[#allocation2 + $0x4] sm:$0xf]
    %v1200 = vld [vmem:[#allocation2 + $0x8] sm:$0xf]
    %v1201 = vld [vmem:[#allocation2 + $0xc] sm:$0xf]
    %v1202 = vld [vmem:[#allocation2 + $0x10] sm:$0xf]
    %v1203 = vld [vmem:[#allocation2 + $0x14] sm:$0xf]
    %v1204 = vld [vmem:[#allocation2 + $0x18] sm:$0xf]
    %v1205 = vld [vmem:[#allocation2 + $0x1c] sm:$0xf]
    %v1206 = vld [vmem:[#allocation2 + $0x20] sm:$0xf]
    %v1207 = vld [vmem:[#allocation2 + $0x24] sm:$0xf]
    %v1208 = vld [vmem:[#allocation2 + $0x28] sm:$0xf]
    %v1209 = vld [vmem:[#allocation2 + $0x2c] sm:$0xf]
    %v1210 = vld [vmem:[#allocation2 + $0x30] sm:$0xf]
    %v1211 = vld [vmem:[#allocation2 + $0x34] sm:$0xf]
    %v1212 = vld [vmem:[#allocation2 + $0x38] sm:$0xf]
    %v1213 = vld [vmem:[#allocation2 + $0x3c] sm:$0xf]
    %v1214 = vld [vmem:[#allocation2 + $0x40] sm:$0xf]
    %v1215 = vld [vmem:[#allocation2 + $0x44] sm:$0xf]
    %v1216 = vld [vmem:[#allocation2 + $0x48] sm:$0xf]
    %v1217 = vld [vmem:[#allocation2 + $0x4c] sm:$0xf]
    %v1218 = vld [vmem:[#allocation2 + $0x50] sm:$0xf]
    %v1219 = vld [vmem:[#allocation2 + $0x54] sm:$0xf]
    %v1220 = vld [vmem:[#allocation2 + $0x58] sm:$0xf]
    %v1221 = vld [vmem:[#allocation2 + $0x5c] sm:$0xf]
    %v1222 = vld [vmem:[#allocation2 + $0x60] sm:$0xf]
    %v1223 = vld [vmem:[#allocation2 + $0x64] sm:$0xf]
    %v1224 = vld [vmem:[#allocation2 + $0x68] sm:$0xf]
    %v1225 = vld [vmem:[#allocation2 + $0x6c] sm:$0xf]
    %v1226 = vld [vmem:[#allocation2 + $0x70] sm:$0xf]
    %v1227 = vld [vmem:[#allocation2 + $0x74] sm:$0xf]
    %v1228 = vld [vmem:[#allocation2 + $0x78] sm:$0xf]
    %v1229 = vld [vmem:[#allocation2 + $0x7c] sm:$0xf]
    %v1230 = vld [vmem:[#allocation2 + $0x80] sm:$0xf]
    %v1231 = vld [vmem:[#allocation2 + $0x84] sm:$0xf]
    %v1232 = vld [vmem:[#allocation2 + $0x88] sm:$0xf]
    %v1233 = vld [vmem:[#allocation2 + $0x8c] sm:$0xf]
    %v1234 = vld [vmem:[#allocation2 + $0x90] sm:$0xf]
    %v1235 = vld [vmem:[#allocation2 + $0x94] sm:$0xf]
    %v1236 = vld [vmem:[#allocation2 + $0x98] sm:$0xf]
    %v1237 = vld [vmem:[#allocation2 + $0x9c] sm:$0xf]
    %v1238 = vld [vmem:[#allocation2 + $0xa0] sm:$0xf]
    %v1239 = vld [vmem:[#allocation2 + $0xa4] sm:$0xf]
    %v1240 = vld [vmem:[#allocation2 + $0xa8] sm:$0xf]
    %v1241 = vld [vmem:[#allocation2 + $0xac] sm:$0xf]
    %v1242 = vld [vmem:[#allocation2 + $0xb0] sm:$0xf]
    %v1243 = vld [vmem:[#allocation2 + $0xb4] sm:$0xf]
    %v1244 = vld [vmem:[#allocation2 + $0xb8] sm:$0xf]
    %v1245 = vld [vmem:[#allocation2 + $0xbc] sm:$0xf]
    %v1246 = vld [vmem:[#allocation2 + $0xc0] sm:$0xf]
    %v1247 = vld [vmem:[#allocation2 + $0xc4] sm:$0xf]
    %v1248 = vld [vmem:[#allocation2 + $0xc8] sm:$0xf]
    %v1249 = vld [vmem:[#allocation2 + $0xcc] sm:$0xf]
    %v1250 = vld [vmem:[#allocation2 + $0xd0] sm:$0xf]
    %v1251 = vld [vmem:[#allocation2 + $0xd4] sm:$0xf]
    %v1252 = vld [vmem:[#allocation2 + $0xd8] sm:$0xf]
    %v1253 = vld [vmem:[#allocation2 + $0xdc] sm:$0xf]
    %v1254 = vld [vmem:[#allocation2 + $0xe0] sm:$0xf]
    %v1255 = vld [vmem:[#allocation2 + $0xe4] sm:$0xf]
    %v1256 = vld [vmem:[#allocation2 + $0xe8] sm:$0xf]
    %v1257 = vld [vmem:[#allocation2 + $0xec] sm:$0xf]
    %v1258 = vld [vmem:[#allocation2 + $0xf0] sm:$0xf]
    %v1259 = vld [vmem:[#allocation2 + $0xf4] sm:$0xf]
    %v1260 = vld [vmem:[#allocation2 + $0xf8] sm:$0xf]
    %v1261 = vld [vmem:[#allocation2 + $0xfc] sm:$0xf]
    %v1262 = vld [vmem:[%s10] sm:$0x1]
    %v1264 = vlaneseq
    %v1265 = vshrl.u32 %v1264, 7
    %v1266 = vsub.s32 0, %v1265
    %v1267 = vrot.slane %v1262, %v1266
    %v1333 = vunpack.c.l.b16 %v1198
    %v1334 = vunpack.c.l.b16 %v1199
    %v1335 = vunpack.c.l.b16 %v1200
    %v1336 = vunpack.c.l.b16 %v1201
    %v1337 = vunpack.c.l.b16 %v1202
    %v1338 = vunpack.c.l.b16 %v1203
    %v1339 = vunpack.c.l.b16 %v1204
    %v1340 = vunpack.c.l.b16 %v1205
    %v1341 = vunpack.c.l.b16 %v1206
    %v1342 = vunpack.c.l.b16 %v1207
    %v1343 = vunpack.c.l.b16 %v1208
    %v1344 = vunpack.c.l.b16 %v1209
    %v1345 = vunpack.c.l.b16 %v1210
    %v1346 = vunpack.c.l.b16 %v1211
    %v1347 = vunpack.c.l.b16 %v1212
    %v1348 = vunpack.c.l.b16 %v1213
    %v1349 = vunpack.c.l.b16 %v1214
    %v1350 = vunpack.c.l.b16 %v1215
    %v1351 = vunpack.c.l.b16 %v1216
    %v1352 = vunpack.c.l.b16 %v1217
    %v1353 = vunpack.c.l.b16 %v1218
    %v1354 = vunpack.c.l.b16 %v1219
    %v1355 = vunpack.c.l.b16 %v1220
    %v1356 = vunpack.c.l.b16 %v1221
    %v1357 = vunpack.c.l.b16 %v1222
    %v1358 = vunpack.c.l.b16 %v1223
    %v1359 = vunpack.c.l.b16 %v1224
    %v1360 = vunpack.c.l.b16 %v1225
    %v1361 = vunpack.c.l.b16 %v1226
    %v1362 = vunpack.c.l.b16 %v1227
    %v1363 = vunpack.c.l.b16 %v1228
    %v1364 = vunpack.c.l.b16 %v1229
    %v1365 = vunpack.c.l.b16 %v1230
    %v1366 = vunpack.c.l.b16 %v1231
    %v1367 = vunpack.c.l.b16 %v1232
    %v1368 = vunpack.c.l.b16 %v1233
    %v1369 = vunpack.c.l.b16 %v1234
    %v1370 = vunpack.c.l.b16 %v1235
    %v1371 = vunpack.c.l.b16 %v1236
    %v1372 = vunpack.c.l.b16 %v1237
    %v1373 = vunpack.c.l.b16 %v1238
    %v1374 = vunpack.c.l.b16 %v1239
    %v1375 = vunpack.c.l.b16 %v1240
    %v1376 = vunpack.c.l.b16 %v1241
    %v1377 = vunpack.c.l.b16 %v1242
    %v1378 = vunpack.c.l.b16 %v1243
    %v1379 = vunpack.c.l.b16 %v1244
    %v1380 = vunpack.c.l.b16 %v1245
    %v1381 = vunpack.c.l.b16 %v1246
    %v1382 = vunpack.c.l.b16 %v1247
    %v1383 = vunpack.c.l.b16 %v1248
    %v1384 = vunpack.c.l.b16 %v1249
    %v1385 = vunpack.c.l.b16 %v1250
    %v1386 = vunpack.c.l.b16 %v1251
    %v1387 = vunpack.c.l.b16 %v1252
    %v1388 = vunpack.c.l.b16 %v1253
    %v1389 = vunpack.c.l.b16 %v1254
    %v1390 = vunpack.c.l.b16 %v1255
    %v1391 = vunpack.c.l.b16 %v1256
    %v1392 = vunpack.c.l.b16 %v1257
    %v1393 = vunpack.c.l.b16 %v1258
    %v1394 = vunpack.c.l.b16 %v1259
    %v1395 = vunpack.c.l.b16 %v1260
    %v1396 = vunpack.c.l.b16 %v1261
    %v1397 = vpack.c.b16 %v1334, %v1333
    %v1398 = vpack.c.b16 %v1336, %v1335
    %v1399 = vpack.c.b16 %v1338, %v1337
    %v1400 = vpack.c.b16 %v1340, %v1339
    %v1401 = vpack.c.b16 %v1342, %v1341
    %v1402 = vpack.c.b16 %v1344, %v1343
    %v1403 = vpack.c.b16 %v1346, %v1345
    %v1404 = vpack.c.b16 %v1348, %v1347
    %v1405 = vpack.c.b16 %v1350, %v1349
    %v1406 = vpack.c.b16 %v1352, %v1351
    %v1407 = vpack.c.b16 %v1354, %v1353
    %v1408 = vpack.c.b16 %v1356, %v1355
    %v1409 = vpack.c.b16 %v1358, %v1357
    %v1410 = vpack.c.b16 %v1360, %v1359
    %v1411 = vpack.c.b16 %v1362, %v1361
    %v1412 = vpack.c.b16 %v1364, %v1363
    %v1413 = vpack.c.b16 %v1366, %v1365
    %v1414 = vpack.c.b16 %v1368, %v1367
    %v1415 = vpack.c.b16 %v1370, %v1369
    %v1416 = vpack.c.b16 %v1372, %v1371
    %v1417 = vpack.c.b16 %v1374, %v1373
    %v1418 = vpack.c.b16 %v1376, %v1375
    %v1419 = vpack.c.b16 %v1378, %v1377
    %v1420 = vpack.c.b16 %v1380, %v1379
    %v1421 = vpack.c.b16 %v1382, %v1381
    %v1422 = vpack.c.b16 %v1384, %v1383
    %v1423 = vpack.c.b16 %v1386, %v1385
    %v1424 = vpack.c.b16 %v1388, %v1387
    %v1425 = vpack.c.b16 %v1390, %v1389
    %v1426 = vpack.c.b16 %v1392, %v1391
    %v1427 = vpack.c.b16 %v1394, %v1393
    %v1428 = vpack.c.b16 %v1396, %v1395
    %1461 = vmatprep.subr.bf16.mxu0 0
    %1462 = vmatpush1.bf16.msra.mxu0 %v1397
    %1463 = vmatprep.subr.bf16.mxu0 0
    %1464 = vmatpush1.bf16.msra.mxu0 %v1398
    %1465 = vmatprep.subr.bf16.mxu0 0
    %1466 = vmatpush1.bf16.msra.mxu0 %v1399
    %1467 = vmatprep.subr.bf16.mxu0 0
    %1468 = vmatpush1.bf16.msra.mxu0 %v1400
    %1469 = vmatprep.subr.bf16.mxu0 0
    %1470 = vmatpush1.bf16.msra.mxu0 %v1401
    %1471 = vmatprep.subr.bf16.mxu0 0
    %1472 = vmatpush1.bf16.msra.mxu0 %v1402
    %1473 = vmatprep.subr.bf16.mxu0 0
    %1474 = vmatpush1.bf16.msra.mxu0 %v1403
    %1475 = vmatprep.subr.bf16.mxu0 0
    %1476 = vmatpush1.bf16.msra.mxu0 %v1404
    %1477 = vmatprep.subr.bf16.mxu0 0
    %1478 = vmatpush1.bf16.msra.mxu0 %v1405
    %1479 = vmatprep.subr.bf16.mxu0 0
    %1480 = vmatpush1.bf16.msra.mxu0 %v1406
    %1481 = vmatprep.subr.bf16.mxu0 0
    %1482 = vmatpush1.bf16.msra.mxu0 %v1407
    %1483 = vmatprep.subr.bf16.mxu0 0
    %1484 = vmatpush1.bf16.msra.mxu0 %v1408
    %1485 = vmatprep.subr.bf16.mxu0 0
    %1486 = vmatpush1.bf16.msra.mxu0 %v1409
    %1487 = vmatprep.subr.bf16.mxu0 0
    %1488 = vmatpush1.bf16.msra.mxu0 %v1410
    %1489 = vmatprep.subr.bf16.mxu0 0
    %1490 = vmatpush1.bf16.msra.mxu0 %v1411
    %1491 = vmatprep.subr.bf16.mxu0 0
    %1492 = vmatpush1.bf16.msra.mxu0 %v1412
    %1493 = vmatprep.mubr.bf16.mxu0 %v1195
    %1494 = vmatmul.mubr.bf16.gmra.mrb[0].mxu0 %v1194
    %v1495 = vpop.f32.mrb[0].mxu0
    %v1496 = vadd.f32 %v1267, %v1495
    %v1497 = vpop.f32.mrb[0].mxu0
    %v1498 = vpop.f32.mrb[0].mxu0
    %v1499 = vpop.f32.mrb[0].mxu0
    %1500 = vdwg.mxu0
    %1501 = vmatprep.subr.bf16.mxu0 0
    %1502 = vmatpush1.bf16.msra.mxu0 %v1413
    %1503 = vmatprep.subr.bf16.mxu0 0
    %1504 = vmatpush1.bf16.msra.mxu0 %v1414
    %1505 = vmatprep.subr.bf16.mxu0 0
    %1506 = vmatpush1.bf16.msra.mxu0 %v1415
    %1507 = vmatprep.subr.bf16.mxu0 0
    %1508 = vmatpush1.bf16.msra.mxu0 %v1416
    %1509 = vmatprep.subr.bf16.mxu0 0
    %1510 = vmatpush1.bf16.msra.mxu0 %v1417
    %1511 = vmatprep.subr.bf16.mxu0 0
    %1512 = vmatpush1.bf16.msra.mxu0 %v1418
    %1513 = vmatprep.subr.bf16.mxu0 0
    %1514 = vmatpush1.bf16.msra.mxu0 %v1419
    %1515 = vmatprep.subr.bf16.mxu0 0
    %1516 = vmatpush1.bf16.msra.mxu0 %v1420
    %1517 = vmatprep.subr.bf16.mxu0 0
    %1518 = vmatpush1.bf16.msra.mxu0 %v1421
    %1519 = vmatprep.subr.bf16.mxu0 0
    %1520 = vmatpush1.bf16.msra.mxu0 %v1422
    %1521 = vmatprep.subr.bf16.mxu0 0
    %1522 = vmatpush1.bf16.msra.mxu0 %v1423
    %1523 = vmatprep.subr.bf16.mxu0 0
    %1524 = vmatpush1.bf16.msra.mxu0 %v1424
    %1525 = vmatprep.subr.bf16.mxu0 0
    %1526 = vmatpush1.bf16.msra.mxu0 %v1425
    %1527 = vmatprep.subr.bf16.mxu0 0
    %1528 = vmatpush1.bf16.msra.mxu0 %v1426
    %1529 = vmatprep.subr.bf16.mxu0 0
    %1530 = vmatpush1.bf16.msra.mxu0 %v1427
    %1531 = vmatprep.subr.bf16.mxu0 0
    %1532 = vmatpush1.bf16.msra.mxu0 %v1428
    %1533 = vmatprep.mubr.bf16.mxu0 %v1197
    %1534 = vmatmul.mubr.bf16.gmra.mrb[0].mxu0 %v1196
    %v1535 = vpop.f32.mrb[0].mxu0
    %v1536 = vadd.f32 %v1496, %v1535
    %v1537 = vpop.f32.mrb[0].mxu0
    %v1538 = vpop.f32.mrb[0].mxu0
    %v1539 = vpop.f32.mrb[0].mxu0
    %1540 = vdwg.mxu0
    %vm1541 = vcmp.lt.s32.totalorder %v753, 6
    %v1542 = vsel %vm1541, %v1536, -1e+30
    %vm1543 = vcmask 64512
    %v1544 = vsel %vm1543, %v1542, -inf
    %1545 = vmax.xlane.f32.xlu0 %v1544
    %v1546 = vpop.xlane.xlu0 %1545
    %v1547 = vsel %vm1541, -1e+30, %v1536
    %v1548 = vsel %vm1543, %v1547, -inf
    %1549 = vmax.xlane.f32.xlu0 %v1548
    %v1550 = vpop.xlane.xlu0 %1549
    %v1551 = vsel %vm1541, %v1546, %v1550
    %v1552 = vsub.f32 %v1536, %v1551
    %v1553 = vmul.f32 %v1552, 1.442695
    %v1554 = vpow.pop %v1553
    %v1555 = vsel %vm1541, %v1554, 0.0
    %v1556 = vsel %vm1543, %v1555, 0.0
    %1557 = vadd.xlane.f32.xlu0 %v1556
    %v1558 = vpop.xlane.xlu0 %1557
    %v1559 = vsel %vm1541, 0.0, %v1554
    %v1560 = vsel %vm1543, %v1559, 0.0
    %1561 = vadd.xlane.f32.xlu0 %v1560
    %v1562 = vpop.xlane.xlu0 %1561
    %v1563 = vlog2.pop %v1558
    %v1564 = vmul.f32 %v1563, 0.6931472
    %v1565 = vlog2.pop %v1562
    %v1566 = vmul.f32 %v1565, 0.6931472
    %v1567 = vsel %vm1541, %v1564, %v1566
    %v1568 = vsub.f32 %v1552, %v1567
    %vm1569 = vcmask 48128
    %1570 = vst.msk [vmem:[%s11] sm:$0xff] %vm1569, %v1568
    %1572 = vrot.lane.b32.xlu0 %v1568, 122
    %v1573 = vpop.permute.xlu0 %1572
    %vm1575 = vcmask 15360
    %1576 = vst.msk [vmem:[%s12] sm:$0xff] %vm1575, %v1573
    // Predicated region
    $region50: #{_forward_both.1} parent=1 // pred_check
      _
    $region51: #{_forward_both.1} parent=1 // pred_check_branch
      %1578 = sbr.rel (0) target = $region53
    $region52: #{_forward_both.1} parent=1 // pred_region
      _
    $region53: #{_forward_both.1} parent=1 // pred_fallthru
      _
    // Predicated region
    $region54: #{_forward_both.1} parent=1 // pred_check
      _
    $region55: #{_forward_both.1} parent=1 // pred_check_branch
      %1580 = sbr.rel (0) target = $region57
    $region56: #{_forward_both.1} parent=1 // pred_region
      _
    $region57: #{_forward_both.1} parent=1 // pred_fallthru
      _
    // Predicated region
    $region58: #{_forward_both.1} parent=1 // pred_check
      _
    $region59: #{_forward_both.1} parent=1 // pred_check_branch
      %1582 = sbr.rel (0) target = $region61
    $region60: #{_forward_both.1} parent=1 // pred_region
      _
    $region61: #{_forward_both.1} parent=1 // pred_fallthru
      _
    // Predicated region
    $region62: #{_forward_both.1} parent=1 // pred_check
      _
    $region63: #{_forward_both.1} parent=1 // pred_check_branch
      %1584 = sbr.rel (0) target = $region65
    $region64: #{_forward_both.1} parent=1 // pred_region
      _
    $region65: #{_forward_both.1} parent=1 // pred_fallthru
      _
    %1585 = vsyncpa [#allocation3], 1

</llo_original>
